<compile_context>
chip_gen: v7x
topology: tpu7x:2x2x1
jax: 0.10.0
libtpu: 0.0.40
codegen_flags: <defaults>
</compile_context>

<pallas_src>
import functools

import numpy as np
import jax
import jax.numpy as jnp
from jax import lax
from jax.experimental import pallas as pl
from jax.experimental.pallas import tpu as pltpu


# ----------------------------------------------------------------------------
# Fused kernel: LIF (recurrent over T) -> depthwise KxK (lane rolls) ->
# T-folded pointwise 1x1 (one MXU matmul) -> SiLU -> per-timestep BatchNorm.
# ----------------------------------------------------------------------------
def _lcb_fused_kernel(x_ref,      # VMEM (T, B, Hp, WC)   folded, zero-padded input
                      dww_ref,    # VMEM (K*K, WC)        per-tap dw weights, lane-tiled
                      wbig_ref,   # VMEM (WC, WCout)      block-diag pointwise weight
                      bias_ref,   # VMEM (1, WCout)       fused (dw+pw) bias per lane
                      sel_ref,    # VMEM (WCout, Cout)    0/1 lane -> channel gather
                      selT_ref,   # VMEM (Cout, WCout)    0/1 channel -> lane scatter
                      tsel_ref,   # VMEM (T, T*R)         0/1 row-block -> timestep gather
                      gamma_ref,  # VMEM (T, Cout)        BNTT gammas (one BN per step)
                      out_ref,    # VMEM (T*R, WCout)     lane-dense output slab
                      dw_ref,     # VMEM scratch (T*R, WC) T-folded depthwise output
                      *, T, K, Cin, H_out, R, beta, thr, gf, inv_n, eps):
    WC = x_ref.shape[3]
    dww = dww_ref[...]                                     # (K*K, WC), hoisted

    # ---- fused LIF recurrence (sequential over T) + depthwise per step -------
    # snn.Leaky (reset_mechanism="subtract"):
    #   reset = H(mem - thr); mem = beta*mem + x - reset*thr; spk = H(mem-thr)*gf
    mem = jnp.zeros(x_ref.shape[1:], jnp.float32)          # (B, Hp, WC)
    for t in range(T):                                     # T small -> static unroll
        reset = (mem > thr).astype(jnp.float32)            # pre-update membrane
        mem = beta * mem + x_ref[t] - reset * thr
        spk = (mem > thr).astype(jnp.float32) * gf         # (B, Hp, WC)

        # depthwise KxK stride 1: reused row views (H taps) + XLU lane rolls (W taps)
        acc = None
        for ki in range(K):
            rows = spk[:, ki:ki + H_out, :].reshape(R, WC)      # (R, WC)
            for kj in range(K):
                sh = (-kj * Cin) % WC                           # left-shift kj*Cin lanes
                shifted = rows if sh == 0 else pltpu.roll(rows, sh, axis=1)
                tap = ki * K + kj
                term = shifted * dww[tap:tap + 1, :]
                acc = term if acc is None else acc + term
        # garbage in lanes >= W_out*Cin is killed by the zero rows of wbig below
        dw_ref[pl.ds(t * R, R), :] = acc

    # ---- T-folded pointwise 1x1: a single (T*R, WC)x(WC, WCout) MXU matmul ---
    pw = jnp.dot(dw_ref[...], wbig_ref[...],
                 preferred_element_type=jnp.float32) + bias_ref[...]

    # ---- SiLU via one EUP transcendental: sigmoid(x) = 0.5*(1 + tanh(x/2)) ---
    act = pw * (0.5 + 0.5 * jnp.tanh(0.5 * pw))

    # ---- per-timestep BatchNorm2d (training stats, bias=None) on the MXU -----
    tsel = tsel_ref[...]                                   # (T, T*R)
    sel = sel_ref[...]                                     # (WCout, Cout)
    row_sum = jnp.dot(tsel, act, preferred_element_type=jnp.float32)        # (T, WCout)
    row_sq = jnp.dot(tsel, act * act, preferred_element_type=jnp.float32)   # (T, WCout)
    ch_sum = jnp.dot(row_sum, sel, preferred_element_type=jnp.float32)      # (T, Cout)
    ch_sq = jnp.dot(row_sq, sel, preferred_element_type=jnp.float32)        # (T, Cout)
    mean = ch_sum * inv_n
    var = ch_sq * inv_n - mean * mean                      # one-pass E[x^2]-mean^2
    scale = gamma_ref[...] * lax.rsqrt(var + eps)          # gamma folded into scale
    mean_l = jnp.dot(mean, selT_ref[...], preferred_element_type=jnp.float32)    # (T, WCout)
    scale_l = jnp.dot(scale, selT_ref[...], preferred_element_type=jnp.float32)  # (T, WCout)

    for t in range(T):                                     # lane-dense (R, 128) stores
        blk = act[t * R:(t + 1) * R, :]
        out_ref[pl.ds(t * R, R), :] = (blk - mean_l[t:t + 1, :]) * scale_l[t:t + 1, :]


# ----------------------------------------------------------------------------
# One-time (numpy) construction of all constant operands.
# ----------------------------------------------------------------------------
def prepare_lcb_constants(p, *, B, T, H, W):
    K, stride, pad = int(p["K"]), int(p["stride"]), int(p["pad"])
    dw_w = np.asarray(p["dw_w"], np.float32)               # (Cin, K, K)
    pw_w = np.asarray(p["pw_w"], np.float32)               # (Cout, Cin)
    Cin, Cout = dw_w.shape[0], pw_w.shape[0]

    assert stride == 1                                     # roll-based depthwise
    assert float(p["thr"]) > 0.0                           # halo-LIF exactness
    H_out = (H + 2 * pad - K) // stride + 1
    W_out = (W + 2 * pad - K) // stride + 1
    assert H_out == H // stride and W_out == W // stride   # module preallocates H//stride
    Hp, Wp = H + 2 * pad, W + 2 * pad
    LANE = 128
    # Folded-lane design limits (one lane group for input and output).
    assert Wp * Cin <= LANE and W_out * Cout <= LANE and LANE % Cin == 0
    WC, WCout, R = LANE, W_out * Cout, B * H_out

    dww = np.zeros((K * K, WC), np.float32)                # per-tap, tiled over lanes
    for ki in range(K):
        for kj in range(K):
            dww[ki * K + kj, :Wp * Cin] = np.tile(dw_w[:, ki, kj], Wp)

    wbig = np.zeros((WC, WCout), np.float32)               # block-diag pointwise weight;
    wbig[:W_out * Cin, :] = np.kron(np.eye(W_out, dtype=np.float32), pw_w.T)
    b_eff = np.asarray(p["pw_b"], np.float32) + pw_w @ np.asarray(p["dw_b"], np.float32)
    bias_l = np.tile(b_eff, W_out).reshape(1, WCout)       # dw bias folded into pw bias
    sel = np.kron(np.ones((W_out, 1), np.float32), np.eye(Cout, dtype=np.float32))
    selT = np.ascontiguousarray(sel.T)
    tsel = np.kron(np.eye(T, dtype=np.float32), np.ones((1, R), np.float32))

    return dict(
        K=K, pad=pad, Cin=Cin, Cout=Cout, H_out=H_out, W_out=W_out,
        Hp=Hp, Wp=Wp, WC=WC, WCout=WCout, R=R,
        beta=float(p["beta"]), thr=float(p["thr"]), gf=float(p["gf"]),
        eps=float(p["eps"]), inv_n=1.0 / float(B * H_out * W_out),
        dww=jnp.asarray(dww), wbig=jnp.asarray(wbig), bias_l=jnp.asarray(bias_l),
        sel=jnp.asarray(sel), selT=jnp.asarray(selT), tsel=jnp.asarray(tsel),
        gamma=jnp.asarray(np.asarray(p["gamma"], np.float32)),
    )


# ----------------------------------------------------------------------------
# Wrapper: minimal per-call layout plumbing + the single fused pallas_call.
# ----------------------------------------------------------------------------
def lcb_v2_small_forward(x, c):
    """x: (B, T, Cin, H, W) float32 (PyTorch layout). Returns (B, T, Cout, H', W')."""
    B, T, Cin, H, W = x.shape
    pad, K = c["pad"], c["K"]
    WC, WCout, R = c["WC"], c["WCout"], c["R"]
    Hp, H_out, W_out, Cout = c["Hp"], c["H_out"], c["W_out"], c["Cout"]

    # Fold (W, Cin) onto the lane axis: (B,T,Cin,H,W) -> (T,B,Hp,WC), lane=j*Cin+c.
    # Halo / lane-pad entries are zero; zero input never crosses the positive LIF
    # threshold, so running the LIF over them is exact (stage-fusion enabler).
    xf = jnp.transpose(x, (1, 0, 3, 4, 2)).astype(jnp.float32)
    xf = jnp.pad(xf, ((0, 0), (0, 0), (pad, pad), (pad, WC // Cin - W - pad), (0, 0)))
    xf = xf.reshape(T, B, Hp, WC)

    kernel = functools.partial(
        _lcb_fused_kernel, T=T, K=K, Cin=Cin, H_out=H_out, R=R,
        beta=c["beta"], thr=c["thr"], gf=c["gf"], inv_n=c["inv_n"], eps=c["eps"])

    vmem = pl.BlockSpec(memory_space=pltpu.MemorySpace.VMEM)
    out = pl.pallas_call(
        kernel,
        out_shape=jax.ShapeDtypeStruct((T * R, WCout), jnp.float32),
        in_specs=[vmem] * 8,
        out_specs=vmem,
        scratch_shapes=[pltpu.VMEM((T * R, WC), jnp.float32)],
    )(xf, c["dww"], c["wbig"], c["bias_l"], c["sel"], c["selT"], c["tsel"],
      c["gamma"])

    # (T*B*H_out, W_out*Cout) -> (B, T, Cout, H_out, W_out)
    out = out.reshape(T, B, H_out, W_out, Cout)
    return jnp.transpose(out, (1, 0, 4, 2, 3))


# ----------------------------------------------------------------------------
# Pure-JAX reference (self-validation of the fused kernel).
# ----------------------------------------------------------------------------
def reference_forward(x, p):
    B, T, Cin, H, W = x.shape
    K, stride, pad = p["K"], p["stride"], p["pad"]
    Cout = p["pw_w"].shape[0]
    beta, thr, gf, eps = p["beta"], p["thr"], p["gf"], p["eps"]
    xt = jnp.transpose(x, (1, 0, 2, 3, 4))
    mem = jnp.zeros((B, Cin, H, W), jnp.float32)
    outs = []
    for t in range(T):
        xi = xt[t]
        reset = (mem > thr).astype(jnp.float32)
        mem = beta * mem + xi - reset * thr
        spk = (mem > thr).astype(jnp.float32) * gf
        dw = lax.conv_general_dilated(
            spk, p["dw_w"].reshape(Cin, 1, K, K),
            window_strides=(stride, stride), padding=[(pad, pad), (pad, pad)],
            feature_group_count=Cin,
            dimension_numbers=("NCHW", "OIHW", "NCHW"))
        dw = dw + p["dw_b"].reshape(1, Cin, 1, 1)
        pw = jnp.einsum("oc,bchw->bohw", p["pw_w"], dw) + p["pw_b"].reshape(1, Cout, 1, 1)
        act = pw * jax.nn.sigmoid(pw)
        mean = jnp.mean(act, axis=(0, 2, 3), keepdims=True)
        var = jnp.mean((act - mean) ** 2, axis=(0, 2, 3), keepdims=True)
        y = p["gamma"][t].reshape(1, Cout, 1, 1) * (act - mean) * lax.rsqrt(var + eps)
        outs.append(y)
    return jnp.transpose(jnp.stack(outs, 0), (1, 0, 2, 3, 4))


if __name__ == "__main__":
    # Small shapes consistent with the module's forward.
    B, T, Cin, Cout, H, W = 2, 4, 4, 8, 16, 16
    K, stride, pad = 3, 1, 1   # "same"-size conv -> output H//stride as the module expects

    key = jax.random.PRNGKey(0)
    k1, k2, k3, k4, k5, k6 = jax.random.split(key, 6)
    params = dict(
        K=K, stride=stride, pad=pad,
        dw_w=0.2 * jax.random.normal(k1, (Cin, K, K), jnp.float32),
        dw_b=0.1 * jax.random.normal(k2, (Cin,), jnp.float32),
        pw_w=0.3 * jax.random.normal(k3, (Cout, Cin), jnp.float32),
        pw_b=0.1 * jax.random.normal(k4, (Cout,), jnp.float32),
        gamma=1.0 + 0.1 * jax.random.normal(k5, (T, Cout), jnp.float32),
        beta=jnp.float32(0.8),   # LIF decay (torch.rand(1) in the module)
        thr=jnp.float32(0.5),    # LIF threshold
        gf=jnp.float32(1.25),    # graded spikes factor
        eps=1e-5,                # BatchNormTT2d eps
    )
    x = jax.random.normal(k6, (B, T, Cin, H, W), jnp.float32)

    consts = prepare_lcb_constants(params, B=B, T=T, H=H, W=W)   # one-time numpy prep
    fwd = jax.jit(lambda inp: lcb_v2_small_forward(inp, consts))

    out = jax.block_until_ready(fwd(x))
    ref = reference_forward(x, params)
    np.testing.assert_allclose(np.asarray(out), np.asarray(ref), rtol=5e-3, atol=5e-3)
    print("KERNEL_OK")
</pallas_src>

<mosaic_0001>
module attributes {stable_mosaic.version = 11 : i64} {
  func.func @_lcb_fused_kernel(%arg0: memref<4x2x18x128xf32, #tpu.memory_space<vmem>>, %arg1: memref<9x128xf32, #tpu.memory_space<vmem>>, %arg2: memref<128x128xf32, #tpu.memory_space<vmem>>, %arg3: memref<1x128xf32, #tpu.memory_space<vmem>>, %arg4: memref<128x8xf32, #tpu.memory_space<vmem>>, %arg5: memref<8x128xf32, #tpu.memory_space<vmem>>, %arg6: memref<4x128xf32, #tpu.memory_space<vmem>>, %arg7: memref<4x8xf32, #tpu.memory_space<vmem>>, %arg8: memref<128x128xf32, #tpu.memory_space<vmem>>, %arg9: memref<128x128xf32, #tpu.memory_space<vmem>>) attributes {dimension_semantics = [], scalar_prefetch = 0 : i64, scratch_operands = 1 : i64, tpu.core_type = #tpu.core_type<tc>} {
    %c0 = arith.constant 0 : index
    %c0_0 = arith.constant 0 : index
    %0 = vector.load %arg1[%c0, %c0_0] : memref<9x128xf32, #tpu.memory_space<vmem>>, vector<9x128xf32>
    %cst = arith.constant 0.000000e+00 : f32
    %1 = vector.broadcast %cst : f32 to vector<2x18x128xf32>
    %cst_1 = arith.constant 5.000000e-01 : f32
    %2 = vector.broadcast %cst_1 : f32 to vector<2x18x128xf32>
    %3 = arith.cmpf ogt, %1, %2 : vector<2x18x128xf32>
    %4 = arith.extui %3 : vector<2x18x128xi1> to vector<2x18x128xi32>
    %5 = arith.sitofp %4 : vector<2x18x128xi32> to vector<2x18x128xf32>
    %cst_2 = arith.constant 8.000000e-01 : f32
    %6 = vector.broadcast %cst_2 : f32 to vector<2x18x128xf32>
    %7 = arith.mulf %6, %1 : vector<2x18x128xf32>
    %c0_3 = arith.constant 0 : index
    %c0_4 = arith.constant 0 : index
    %c0_5 = arith.constant 0 : index
    %c0_6 = arith.constant 0 : index
    %8 = vector.load %arg0[%c0_3, %c0_4, %c0_5, %c0_6] : memref<4x2x18x128xf32, #tpu.memory_space<vmem>>, vector<1x2x18x128xf32>
    %9 = vector.shape_cast %8 : vector<1x2x18x128xf32> to vector<2x18x128xf32>
    %10 = arith.addf %7, %9 : vector<2x18x128xf32>
    %cst_7 = arith.constant 5.000000e-01 : f32
    %11 = vector.broadcast %cst_7 : f32 to vector<2x18x128xf32>
    %12 = arith.mulf %5, %11 : vector<2x18x128xf32>
    %13 = arith.subf %10, %12 : vector<2x18x128xf32>
    %cst_8 = arith.constant 5.000000e-01 : f32
    %14 = vector.broadcast %cst_8 : f32 to vector<2x18x128xf32>
    %15 = arith.cmpf ogt, %13, %14 : vector<2x18x128xf32>
    %16 = arith.extui %15 : vector<2x18x128xi1> to vector<2x18x128xi32>
    %17 = arith.sitofp %16 : vector<2x18x128xi32> to vector<2x18x128xf32>
    %cst_9 = arith.constant 1.250000e+00 : f32
    %18 = vector.broadcast %cst_9 : f32 to vector<2x18x128xf32>
    %19 = arith.mulf %17, %18 : vector<2x18x128xf32>
    %20 = vector.extract_strided_slice %19 {offsets = [0, 0, 0], sizes = [2, 16, 128], strides = [1, 1, 1]} : vector<2x18x128xf32> to vector<2x16x128xf32>
    %21 = vector.shape_cast %20 : vector<2x16x128xf32> to vector<32x128xf32>
    %22 = vector.extract_strided_slice %0 {offsets = [0, 0], sizes = [1, 128], strides = [1, 1]} : vector<9x128xf32> to vector<1x128xf32>
    %23 = vector.broadcast %22 : vector<1x128xf32> to vector<32x128xf32>
    %24 = arith.mulf %21, %23 : vector<32x128xf32>
    %c124_i32 = arith.constant 124 : i32
    %25 = tpu.dynamic_rotate %21 by %c124_i32 dim 1 : vector<32x128xf32>, i32 -> vector<32x128xf32>
    %26 = vector.extract_strided_slice %0 {offsets = [1, 0], sizes = [1, 128], strides = [1, 1]} : vector<9x128xf32> to vector<1x128xf32>
    %27 = vector.broadcast %26 : vector<1x128xf32> to vector<32x128xf32>
    %28 = arith.mulf %25, %27 : vector<32x128xf32>
    %29 = arith.addf %24, %28 : vector<32x128xf32>
    %c120_i32 = arith.constant 120 : i32
    %30 = tpu.dynamic_rotate %21 by %c120_i32 dim 1 : vector<32x128xf32>, i32 -> vector<32x128xf32>
    %31 = vector.extract_strided_slice %0 {offsets = [2, 0], sizes = [1, 128], strides = [1, 1]} : vector<9x128xf32> to vector<1x128xf32>
    %32 = vector.broadcast %31 : vector<1x128xf32> to vector<32x128xf32>
    %33 = arith.mulf %30, %32 : vector<32x128xf32>
    %34 = arith.addf %29, %33 : vector<32x128xf32>
    %35 = vector.extract_strided_slice %19 {offsets = [0, 1, 0], sizes = [2, 16, 128], strides = [1, 1, 1]} : vector<2x18x128xf32> to vector<2x16x128xf32>
    %36 = vector.shape_cast %35 : vector<2x16x128xf32> to vector<32x128xf32>
    %37 = vector.extract_strided_slice %0 {offsets = [3, 0], sizes = [1, 128], strides = [1, 1]} : vector<9x128xf32> to vector<1x128xf32>
    %38 = vector.broadcast %37 : vector<1x128xf32> to vector<32x128xf32>
    %39 = arith.mulf %36, %38 : vector<32x128xf32>
    %40 = arith.addf %34, %39 : vector<32x128xf32>
    %c124_i32_10 = arith.constant 124 : i32
    %41 = tpu.dynamic_rotate %36 by %c124_i32_10 dim 1 : vector<32x128xf32>, i32 -> vector<32x128xf32>
    %42 = vector.extract_strided_slice %0 {offsets = [4, 0], sizes = [1, 128], strides = [1, 1]} : vector<9x128xf32> to vector<1x128xf32>
    %43 = vector.broadcast %42 : vector<1x128xf32> to vector<32x128xf32>
    %44 = arith.mulf %41, %43 : vector<32x128xf32>
    %45 = arith.addf %40, %44 : vector<32x128xf32>
    %c120_i32_11 = arith.constant 120 : i32
    %46 = tpu.dynamic_rotate %36 by %c120_i32_11 dim 1 : vector<32x128xf32>, i32 -> vector<32x128xf32>
    %47 = vector.extract_strided_slice %0 {offsets = [5, 0], sizes = [1, 128], strides = [1, 1]} : vector<9x128xf32> to vector<1x128xf32>
    %48 = vector.broadcast %47 : vector<1x128xf32> to vector<32x128xf32>
    %49 = arith.mulf %46, %48 : vector<32x128xf32>
    %50 = arith.addf %45, %49 : vector<32x128xf32>
    %51 = vector.extract_strided_slice %19 {offsets = [0, 2, 0], sizes = [2, 16, 128], strides = [1, 1, 1]} : vector<2x18x128xf32> to vector<2x16x128xf32>
    %52 = vector.shape_cast %51 : vector<2x16x128xf32> to vector<32x128xf32>
    %53 = vector.extract_strided_slice %0 {offsets = [6, 0], sizes = [1, 128], strides = [1, 1]} : vector<9x128xf32> to vector<1x128xf32>
    %54 = vector.broadcast %53 : vector<1x128xf32> to vector<32x128xf32>
    %55 = arith.mulf %52, %54 : vector<32x128xf32>
    %56 = arith.addf %50, %55 : vector<32x128xf32>
    %c124_i32_12 = arith.constant 124 : i32
    %57 = tpu.dynamic_rotate %52 by %c124_i32_12 dim 1 : vector<32x128xf32>, i32 -> vector<32x128xf32>
    %58 = vector.extract_strided_slice %0 {offsets = [7, 0], sizes = [1, 128], strides = [1, 1]} : vector<9x128xf32> to vector<1x128xf32>
    %59 = vector.broadcast %58 : vector<1x128xf32> to vector<32x128xf32>
    %60 = arith.mulf %57, %59 : vector<32x128xf32>
    %61 = arith.addf %56, %60 : vector<32x128xf32>
    %c120_i32_13 = arith.constant 120 : i32
    %62 = tpu.dynamic_rotate %52 by %c120_i32_13 dim 1 : vector<32x128xf32>, i32 -> vector<32x128xf32>
    %63 = vector.extract_strided_slice %0 {offsets = [8, 0], sizes = [1, 128], strides = [1, 1]} : vector<9x128xf32> to vector<1x128xf32>
    %64 = vector.broadcast %63 : vector<1x128xf32> to vector<32x128xf32>
    %65 = arith.mulf %62, %64 : vector<32x128xf32>
    %66 = arith.addf %61, %65 : vector<32x128xf32>
    %c0_14 = arith.constant 0 : index
    %c0_15 = arith.constant 0 : index
    %67 = vector.load %arg9[%c0_14, %c0_15] : memref<128x128xf32, #tpu.memory_space<vmem>>, vector<32x128xf32>
    tpu.vector_store %arg9[%c0_14, %c0_15], %66 {strides = array<i32>} : memref<128x128xf32, #tpu.memory_space<vmem>>, vector<32x128xf32>,
    %cst_16 = arith.constant 5.000000e-01 : f32
    %68 = vector.broadcast %cst_16 : f32 to vector<2x18x128xf32>
    %69 = arith.cmpf ogt, %13, %68 : vector<2x18x128xf32>
    %70 = arith.extui %69 : vector<2x18x128xi1> to vector<2x18x128xi32>
    %71 = arith.sitofp %70 : vector<2x18x128xi32> to vector<2x18x128xf32>
    %cst_17 = arith.constant 8.000000e-01 : f32
    %72 = vector.broadcast %cst_17 : f32 to vector<2x18x128xf32>
    %73 = arith.mulf %72, %13 : vector<2x18x128xf32>
    %c1 = arith.constant 1 : index
    %c0_18 = arith.constant 0 : index
    %c0_19 = arith.constant 0 : index
    %c0_20 = arith.constant 0 : index
    %74 = vector.load %arg0[%c1, %c0_18, %c0_19, %c0_20] : memref<4x2x18x128xf32, #tpu.memory_space<vmem>>, vector<1x2x18x128xf32>
    %75 = vector.shape_cast %74 : vector<1x2x18x128xf32> to vector<2x18x128xf32>
    %76 = arith.addf %73, %75 : vector<2x18x128xf32>
    %cst_21 = arith.constant 5.000000e-01 : f32
    %77 = vector.broadcast %cst_21 : f32 to vector<2x18x128xf32>
    %78 = arith.mulf %71, %77 : vector<2x18x128xf32>
    %79 = arith.subf %76, %78 : vector<2x18x128xf32>
    %cst_22 = arith.constant 5.000000e-01 : f32
    %80 = vector.broadcast %cst_22 : f32 to vector<2x18x128xf32>
    %81 = arith.cmpf ogt, %79, %80 : vector<2x18x128xf32>
    %82 = arith.extui %81 : vector<2x18x128xi1> to vector<2x18x128xi32>
    %83 = arith.sitofp %82 : vector<2x18x128xi32> to vector<2x18x128xf32>
    %cst_23 = arith.constant 1.250000e+00 : f32
    %84 = vector.broadcast %cst_23 : f32 to vector<2x18x128xf32>
    %85 = arith.mulf %83, %84 : vector<2x18x128xf32>
    %86 = vector.extract_strided_slice %85 {offsets = [0, 0, 0], sizes = [2, 16, 128], strides = [1, 1, 1]} : vector<2x18x128xf32> to vector<2x16x128xf32>
    %87 = vector.shape_cast %86 : vector<2x16x128xf32> to vector<32x128xf32>
    %88 = vector.extract_strided_slice %0 {offsets = [0, 0], sizes = [1, 128], strides = [1, 1]} : vector<9x128xf32> to vector<1x128xf32>
    %89 = vector.broadcast %88 : vector<1x128xf32> to vector<32x128xf32>
    %90 = arith.mulf %87, %89 : vector<32x128xf32>
    %c124_i32_24 = arith.constant 124 : i32
    %91 = tpu.dynamic_rotate %87 by %c124_i32_24 dim 1 : vector<32x128xf32>, i32 -> vector<32x128xf32>
    %92 = vector.extract_strided_slice %0 {offsets = [1, 0], sizes = [1, 128], strides = [1, 1]} : vector<9x128xf32> to vector<1x128xf32>
    %93 = vector.broadcast %92 : vector<1x128xf32> to vector<32x128xf32>
    %94 = arith.mulf %91, %93 : vector<32x128xf32>
    %95 = arith.addf %90, %94 : vector<32x128xf32>
    %c120_i32_25 = arith.constant 120 : i32
    %96 = tpu.dynamic_rotate %87 by %c120_i32_25 dim 1 : vector<32x128xf32>, i32 -> vector<32x128xf32>
    %97 = vector.extract_strided_slice %0 {offsets = [2, 0], sizes = [1, 128], strides = [1, 1]} : vector<9x128xf32> to vector<1x128xf32>
    %98 = vector.broadcast %97 : vector<1x128xf32> to vector<32x128xf32>
    %99 = arith.mulf %96, %98 : vector<32x128xf32>
    %100 = arith.addf %95, %99 : vector<32x128xf32>
    %101 = vector.extract_strided_slice %85 {offsets = [0, 1, 0], sizes = [2, 16, 128], strides = [1, 1, 1]} : vector<2x18x128xf32> to vector<2x16x128xf32>
    %102 = vector.shape_cast %101 : vector<2x16x128xf32> to vector<32x128xf32>
    %103 = vector.extract_strided_slice %0 {offsets = [3, 0], sizes = [1, 128], strides = [1, 1]} : vector<9x128xf32> to vector<1x128xf32>
    %104 = vector.broadcast %103 : vector<1x128xf32> to vector<32x128xf32>
    %105 = arith.mulf %102, %104 : vector<32x128xf32>
    %106 = arith.addf %100, %105 : vector<32x128xf32>
    %c124_i32_26 = arith.constant 124 : i32
    %107 = tpu.dynamic_rotate %102 by %c124_i32_26 dim 1 : vector<32x128xf32>, i32 -> vector<32x128xf32>
    %108 = vector.extract_strided_slice %0 {offsets = [4, 0], sizes = [1, 128], strides = [1, 1]} : vector<9x128xf32> to vector<1x128xf32>
    %109 = vector.broadcast %108 : vector<1x128xf32> to vector<32x128xf32>
    %110 = arith.mulf %107, %109 : vector<32x128xf32>
    %111 = arith.addf %106, %110 : vector<32x128xf32>
    %c120_i32_27 = arith.constant 120 : i32
    %112 = tpu.dynamic_rotate %102 by %c120_i32_27 dim 1 : vector<32x128xf32>, i32 -> vector<32x128xf32>
    %113 = vector.extract_strided_slice %0 {offsets = [5, 0], sizes = [1, 128], strides = [1, 1]} : vector<9x128xf32> to vector<1x128xf32>
    %114 = vector.broadcast %113 : vector<1x128xf32> to vector<32x128xf32>
    %115 = arith.mulf %112, %114 : vector<32x128xf32>
    %116 = arith.addf %111, %115 : vector<32x128xf32>
    %117 = vector.extract_strided_slice %85 {offsets = [0, 2, 0], sizes = [2, 16, 128], strides = [1, 1, 1]} : vector<2x18x128xf32> to vector<2x16x128xf32>
    %118 = vector.shape_cast %117 : vector<2x16x128xf32> to vector<32x128xf32>
    %119 = vector.extract_strided_slice %0 {offsets = [6, 0], sizes = [1, 128], strides = [1, 1]} : vector<9x128xf32> to vector<1x128xf32>
    %120 = vector.broadcast %119 : vector<1x128xf32> to vector<32x128xf32>
    %121 = arith.mulf %118, %120 : vector<32x128xf32>
    %122 = arith.addf %116, %121 : vector<32x128xf32>
    %c124_i32_28 = arith.constant 124 : i32
    %123 = tpu.dynamic_rotate %118 by %c124_i32_28 dim 1 : vector<32x128xf32>, i32 -> vector<32x128xf32>
    %124 = vector.extract_strided_slice %0 {offsets = [7, 0], sizes = [1, 128], strides = [1, 1]} : vector<9x128xf32> to vector<1x128xf32>
    %125 = vector.broadcast %124 : vector<1x128xf32> to vector<32x128xf32>
    %126 = arith.mulf %123, %125 : vector<32x128xf32>
    %127 = arith.addf %122, %126 : vector<32x128xf32>
    %c120_i32_29 = arith.constant 120 : i32
    %128 = tpu.dynamic_rotate %118 by %c120_i32_29 dim 1 : vector<32x128xf32>, i32 -> vector<32x128xf32>
    %129 = vector.extract_strided_slice %0 {offsets = [8, 0], sizes = [1, 128], strides = [1, 1]} : vector<9x128xf32> to vector<1x128xf32>
    %130 = vector.broadcast %129 : vector<1x128xf32> to vector<32x128xf32>
    %131 = arith.mulf %128, %130 : vector<32x128xf32>
    %132 = arith.addf %127, %131 : vector<32x128xf32>
    %c32 = arith.constant 32 : index
    %c0_30 = arith.constant 0 : index
    %133 = vector.load %arg9[%c32, %c0_30] : memref<128x128xf32, #tpu.memory_space<vmem>>, vector<32x128xf32>
    tpu.vector_store %arg9[%c32, %c0_30], %132 {strides = array<i32>} : memref<128x128xf32, #tpu.memory_space<vmem>>, vector<32x128xf32>,
    %cst_31 = arith.constant 5.000000e-01 : f32
    %134 = vector.broadcast %cst_31 : f32 to vector<2x18x128xf32>
    %135 = arith.cmpf ogt, %79, %134 : vector<2x18x128xf32>
    %136 = arith.extui %135 : vector<2x18x128xi1> to vector<2x18x128xi32>
    %137 = arith.sitofp %136 : vector<2x18x128xi32> to vector<2x18x128xf32>
    %cst_32 = arith.constant 8.000000e-01 : f32
    %138 = vector.broadcast %cst_32 : f32 to vector<2x18x128xf32>
    %139 = arith.mulf %138, %79 : vector<2x18x128xf32>
    %c2 = arith.constant 2 : index
    %c0_33 = arith.constant 0 : index
    %c0_34 = arith.constant 0 : index
    %c0_35 = arith.constant 0 : index
    %140 = vector.load %arg0[%c2, %c0_33, %c0_34, %c0_35] : memref<4x2x18x128xf32, #tpu.memory_space<vmem>>, vector<1x2x18x128xf32>
    %141 = vector.shape_cast %140 : vector<1x2x18x128xf32> to vector<2x18x128xf32>
    %142 = arith.addf %139, %141 : vector<2x18x128xf32>
    %cst_36 = arith.constant 5.000000e-01 : f32
    %143 = vector.broadcast %cst_36 : f32 to vector<2x18x128xf32>
    %144 = arith.mulf %137, %143 : vector<2x18x128xf32>
    %145 = arith.subf %142, %144 : vector<2x18x128xf32>
    %cst_37 = arith.constant 5.000000e-01 : f32
    %146 = vector.broadcast %cst_37 : f32 to vector<2x18x128xf32>
    %147 = arith.cmpf ogt, %145, %146 : vector<2x18x128xf32>
    %148 = arith.extui %147 : vector<2x18x128xi1> to vector<2x18x128xi32>
    %149 = arith.sitofp %148 : vector<2x18x128xi32> to vector<2x18x128xf32>
    %cst_38 = arith.constant 1.250000e+00 : f32
    %150 = vector.broadcast %cst_38 : f32 to vector<2x18x128xf32>
    %151 = arith.mulf %149, %150 : vector<2x18x128xf32>
    %152 = vector.extract_strided_slice %151 {offsets = [0, 0, 0], sizes = [2, 16, 128], strides = [1, 1, 1]} : vector<2x18x128xf32> to vector<2x16x128xf32>
    %153 = vector.shape_cast %152 : vector<2x16x128xf32> to vector<32x128xf32>
    %154 = vector.extract_strided_slice %0 {offsets = [0, 0], sizes = [1, 128], strides = [1, 1]} : vector<9x128xf32> to vector<1x128xf32>
    %155 = vector.broadcast %154 : vector<1x128xf32> to vector<32x128xf32>
    %156 = arith.mulf %153, %155 : vector<32x128xf32>
    %c124_i32_39 = arith.constant 124 : i32
    %157 = tpu.dynamic_rotate %153 by %c124_i32_39 dim 1 : vector<32x128xf32>, i32 -> vector<32x128xf32>
    %158 = vector.extract_strided_slice %0 {offsets = [1, 0], sizes = [1, 128], strides = [1, 1]} : vector<9x128xf32> to vector<1x128xf32>
    %159 = vector.broadcast %158 : vector<1x128xf32> to vector<32x128xf32>
    %160 = arith.mulf %157, %159 : vector<32x128xf32>
    %161 = arith.addf %156, %160 : vector<32x128xf32>
    %c120_i32_40 = arith.constant 120 : i32
    %162 = tpu.dynamic_rotate %153 by %c120_i32_40 dim 1 : vector<32x128xf32>, i32 -> vector<32x128xf32>
    %163 = vector.extract_strided_slice %0 {offsets = [2, 0], sizes = [1, 128], strides = [1, 1]} : vector<9x128xf32> to vector<1x128xf32>
    %164 = vector.broadcast %163 : vector<1x128xf32> to vector<32x128xf32>
    %165 = arith.mulf %162, %164 : vector<32x128xf32>
    %166 = arith.addf %161, %165 : vector<32x128xf32>
    %167 = vector.extract_strided_slice %151 {offsets = [0, 1, 0], sizes = [2, 16, 128], strides = [1, 1, 1]} : vector<2x18x128xf32> to vector<2x16x128xf32>
    %168 = vector.shape_cast %167 : vector<2x16x128xf32> to vector<32x128xf32>
    %169 = vector.extract_strided_slice %0 {offsets = [3, 0], sizes = [1, 128], strides = [1, 1]} : vector<9x128xf32> to vector<1x128xf32>
    %170 = vector.broadcast %169 : vector<1x128xf32> to vector<32x128xf32>
    %171 = arith.mulf %168, %170 : vector<32x128xf32>
    %172 = arith.addf %166, %171 : vector<32x128xf32>
    %c124_i32_41 = arith.constant 124 : i32
    %173 = tpu.dynamic_rotate %168 by %c124_i32_41 dim 1 : vector<32x128xf32>, i32 -> vector<32x128xf32>
    %174 = vector.extract_strided_slice %0 {offsets = [4, 0], sizes = [1, 128], strides = [1, 1]} : vector<9x128xf32> to vector<1x128xf32>
    %175 = vector.broadcast %174 : vector<1x128xf32> to vector<32x128xf32>
    %176 = arith.mulf %173, %175 : vector<32x128xf32>
    %177 = arith.addf %172, %176 : vector<32x128xf32>
    %c120_i32_42 = arith.constant 120 : i32
    %178 = tpu.dynamic_rotate %168 by %c120_i32_42 dim 1 : vector<32x128xf32>, i32 -> vector<32x128xf32>
    %179 = vector.extract_strided_slice %0 {offsets = [5, 0], sizes = [1, 128], strides = [1, 1]} : vector<9x128xf32> to vector<1x128xf32>
    %180 = vector.broadcast %179 : vector<1x128xf32> to vector<32x128xf32>
    %181 = arith.mulf %178, %180 : vector<32x128xf32>
    %182 = arith.addf %177, %181 : vector<32x128xf32>
    %183 = vector.extract_strided_slice %151 {offsets = [0, 2, 0], sizes = [2, 16, 128], strides = [1, 1, 1]} : vector<2x18x128xf32> to vector<2x16x128xf32>
    %184 = vector.shape_cast %183 : vector<2x16x128xf32> to vector<32x128xf32>
    %185 = vector.extract_strided_slice %0 {offsets = [6, 0], sizes = [1, 128], strides = [1, 1]} : vector<9x128xf32> to vector<1x128xf32>
    %186 = vector.broadcast %185 : vector<1x128xf32> to vector<32x128xf32>
    %187 = arith.mulf %184, %186 : vector<32x128xf32>
    %188 = arith.addf %182, %187 : vector<32x128xf32>
    %c124_i32_43 = arith.constant 124 : i32
    %189 = tpu.dynamic_rotate %184 by %c124_i32_43 dim 1 : vector<32x128xf32>, i32 -> vector<32x128xf32>
    %190 = vector.extract_strided_slice %0 {offsets = [7, 0], sizes = [1, 128], strides = [1, 1]} : vector<9x128xf32> to vector<1x128xf32>
    %191 = vector.broadcast %190 : vector<1x128xf32> to vector<32x128xf32>
    %192 = arith.mulf %189, %191 : vector<32x128xf32>
    %193 = arith.addf %188, %192 : vector<32x128xf32>
    %c120_i32_44 = arith.constant 120 : i32
    %194 = tpu.dynamic_rotate %184 by %c120_i32_44 dim 1 : vector<32x128xf32>, i32 -> vector<32x128xf32>
    %195 = vector.extract_strided_slice %0 {offsets = [8, 0], sizes = [1, 128], strides = [1, 1]} : vector<9x128xf32> to vector<1x128xf32>
    %196 = vector.broadcast %195 : vector<1x128xf32> to vector<32x128xf32>
    %197 = arith.mulf %194, %196 : vector<32x128xf32>
    %198 = arith.addf %193, %197 : vector<32x128xf32>
    %c64 = arith.constant 64 : index
    %c0_45 = arith.constant 0 : index
    %199 = vector.load %arg9[%c64, %c0_45] : memref<128x128xf32, #tpu.memory_space<vmem>>, vector<32x128xf32>
    tpu.vector_store %arg9[%c64, %c0_45], %198 {strides = array<i32>} : memref<128x128xf32, #tpu.memory_space<vmem>>, vector<32x128xf32>,
    %cst_46 = arith.constant 5.000000e-01 : f32
    %200 = vector.broadcast %cst_46 : f32 to vector<2x18x128xf32>
    %201 = arith.cmpf ogt, %145, %200 : vector<2x18x128xf32>
    %202 = arith.extui %201 : vector<2x18x128xi1> to vector<2x18x128xi32>
    %203 = arith.sitofp %202 : vector<2x18x128xi32> to vector<2x18x128xf32>
    %cst_47 = arith.constant 8.000000e-01 : f32
    %204 = vector.broadcast %cst_47 : f32 to vector<2x18x128xf32>
    %205 = arith.mulf %204, %145 : vector<2x18x128xf32>
    %c3 = arith.constant 3 : index
    %c0_48 = arith.constant 0 : index
    %c0_49 = arith.constant 0 : index
    %c0_50 = arith.constant 0 : index
    %206 = vector.load %arg0[%c3, %c0_48, %c0_49, %c0_50] : memref<4x2x18x128xf32, #tpu.memory_space<vmem>>, vector<1x2x18x128xf32>
    %207 = vector.shape_cast %206 : vector<1x2x18x128xf32> to vector<2x18x128xf32>
    %208 = arith.addf %205, %207 : vector<2x18x128xf32>
    %cst_51 = arith.constant 5.000000e-01 : f32
    %209 = vector.broadcast %cst_51 : f32 to vector<2x18x128xf32>
    %210 = arith.mulf %203, %209 : vector<2x18x128xf32>
    %211 = arith.subf %208, %210 : vector<2x18x128xf32>
    %cst_52 = arith.constant 5.000000e-01 : f32
    %212 = vector.broadcast %cst_52 : f32 to vector<2x18x128xf32>
    %213 = arith.cmpf ogt, %211, %212 : vector<2x18x128xf32>
    %214 = arith.extui %213 : vector<2x18x128xi1> to vector<2x18x128xi32>
    %215 = arith.sitofp %214 : vector<2x18x128xi32> to vector<2x18x128xf32>
    %cst_53 = arith.constant 1.250000e+00 : f32
    %216 = vector.broadcast %cst_53 : f32 to vector<2x18x128xf32>
    %217 = arith.mulf %215, %216 : vector<2x18x128xf32>
    %218 = vector.extract_strided_slice %217 {offsets = [0, 0, 0], sizes = [2, 16, 128], strides = [1, 1, 1]} : vector<2x18x128xf32> to vector<2x16x128xf32>
    %219 = vector.shape_cast %218 : vector<2x16x128xf32> to vector<32x128xf32>
    %220 = vector.extract_strided_slice %0 {offsets = [0, 0], sizes = [1, 128], strides = [1, 1]} : vector<9x128xf32> to vector<1x128xf32>
    %221 = vector.broadcast %220 : vector<1x128xf32> to vector<32x128xf32>
    %222 = arith.mulf %219, %221 : vector<32x128xf32>
    %c124_i32_54 = arith.constant 124 : i32
    %223 = tpu.dynamic_rotate %219 by %c124_i32_54 dim 1 : vector<32x128xf32>, i32 -> vector<32x128xf32>
    %224 = vector.extract_strided_slice %0 {offsets = [1, 0], sizes = [1, 128], strides = [1, 1]} : vector<9x128xf32> to vector<1x128xf32>
    %225 = vector.broadcast %224 : vector<1x128xf32> to vector<32x128xf32>
    %226 = arith.mulf %223, %225 : vector<32x128xf32>
    %227 = arith.addf %222, %226 : vector<32x128xf32>
    %c120_i32_55 = arith.constant 120 : i32
    %228 = tpu.dynamic_rotate %219 by %c120_i32_55 dim 1 : vector<32x128xf32>, i32 -> vector<32x128xf32>
    %229 = vector.extract_strided_slice %0 {offsets = [2, 0], sizes = [1, 128], strides = [1, 1]} : vector<9x128xf32> to vector<1x128xf32>
    %230 = vector.broadcast %229 : vector<1x128xf32> to vector<32x128xf32>
    %231 = arith.mulf %228, %230 : vector<32x128xf32>
    %232 = arith.addf %227, %231 : vector<32x128xf32>
    %233 = vector.extract_strided_slice %217 {offsets = [0, 1, 0], sizes = [2, 16, 128], strides = [1, 1, 1]} : vector<2x18x128xf32> to vector<2x16x128xf32>
    %234 = vector.shape_cast %233 : vector<2x16x128xf32> to vector<32x128xf32>
    %235 = vector.extract_strided_slice %0 {offsets = [3, 0], sizes = [1, 128], strides = [1, 1]} : vector<9x128xf32> to vector<1x128xf32>
    %236 = vector.broadcast %235 : vector<1x128xf32> to vector<32x128xf32>
    %237 = arith.mulf %234, %236 : vector<32x128xf32>
    %238 = arith.addf %232, %237 : vector<32x128xf32>
    %c124_i32_56 = arith.constant 124 : i32
    %239 = tpu.dynamic_rotate %234 by %c124_i32_56 dim 1 : vector<32x128xf32>, i32 -> vector<32x128xf32>
    %240 = vector.extract_strided_slice %0 {offsets = [4, 0], sizes = [1, 128], strides = [1, 1]} : vector<9x128xf32> to vector<1x128xf32>
    %241 = vector.broadcast %240 : vector<1x128xf32> to vector<32x128xf32>
    %242 = arith.mulf %239, %241 : vector<32x128xf32>
    %243 = arith.addf %238, %242 : vector<32x128xf32>
    %c120_i32_57 = arith.constant 120 : i32
    %244 = tpu.dynamic_rotate %234 by %c120_i32_57 dim 1 : vector<32x128xf32>, i32 -> vector<32x128xf32>
    %245 = vector.extract_strided_slice %0 {offsets = [5, 0], sizes = [1, 128], strides = [1, 1]} : vector<9x128xf32> to vector<1x128xf32>
    %246 = vector.broadcast %245 : vector<1x128xf32> to vector<32x128xf32>
    %247 = arith.mulf %244, %246 : vector<32x128xf32>
    %248 = arith.addf %243, %247 : vector<32x128xf32>
    %249 = vector.extract_strided_slice %217 {offsets = [0, 2, 0], sizes = [2, 16, 128], strides = [1, 1, 1]} : vector<2x18x128xf32> to vector<2x16x128xf32>
    %250 = vector.shape_cast %249 : vector<2x16x128xf32> to vector<32x128xf32>
    %251 = vector.extract_strided_slice %0 {offsets = [6, 0], sizes = [1, 128], strides = [1, 1]} : vector<9x128xf32> to vector<1x128xf32>
    %252 = vector.broadcast %251 : vector<1x128xf32> to vector<32x128xf32>
    %253 = arith.mulf %250, %252 : vector<32x128xf32>
    %254 = arith.addf %248, %253 : vector<32x128xf32>
    %c124_i32_58 = arith.constant 124 : i32
    %255 = tpu.dynamic_rotate %250 by %c124_i32_58 dim 1 : vector<32x128xf32>, i32 -> vector<32x128xf32>
    %256 = vector.extract_strided_slice %0 {offsets = [7, 0], sizes = [1, 128], strides = [1, 1]} : vector<9x128xf32> to vector<1x128xf32>
    %257 = vector.broadcast %256 : vector<1x128xf32> to vector<32x128xf32>
    %258 = arith.mulf %255, %257 : vector<32x128xf32>
    %259 = arith.addf %254, %258 : vector<32x128xf32>
    %c120_i32_59 = arith.constant 120 : i32
    %260 = tpu.dynamic_rotate %250 by %c120_i32_59 dim 1 : vector<32x128xf32>, i32 -> vector<32x128xf32>
    %261 = vector.extract_strided_slice %0 {offsets = [8, 0], sizes = [1, 128], strides = [1, 1]} : vector<9x128xf32> to vector<1x128xf32>
    %262 = vector.broadcast %261 : vector<1x128xf32> to vector<32x128xf32>
    %263 = arith.mulf %260, %262 : vector<32x128xf32>
    %264 = arith.addf %259, %263 : vector<32x128xf32>
    %c96 = arith.constant 96 : index
    %c0_60 = arith.constant 0 : index
    %265 = vector.load %arg9[%c96, %c0_60] : memref<128x128xf32, #tpu.memory_space<vmem>>, vector<32x128xf32>
    tpu.vector_store %arg9[%c96, %c0_60], %264 {strides = array<i32>} : memref<128x128xf32, #tpu.memory_space<vmem>>, vector<32x128xf32>,
    %c0_61 = arith.constant 0 : index
    %c0_62 = arith.constant 0 : index
    %266 = vector.load %arg9[%c0_61, %c0_62] : memref<128x128xf32, #tpu.memory_space<vmem>>, vector<128x128xf32>
    %c0_63 = arith.constant 0 : index
    %c0_64 = arith.constant 0 : index
    %267 = vector.load %arg2[%c0_63, %c0_64] : memref<128x128xf32, #tpu.memory_space<vmem>>, vector<128x128xf32>
    %cst_65 = arith.constant dense<0.000000e+00> : vector<128x128xf32>
    %268 = tpu.matmul %266, %267, %cst_65 {dimension_numbers = #tpu.dot_dimension_numbers<[1], [0], [0], [1], [0, 0, 1, 1], [], []>} : vector<128x128xf32>, vector<128x128xf32>, vector<128x128xf32> -> vector<128x128xf32>
    %c0_66 = arith.constant 0 : index
    %c0_67 = arith.constant 0 : index
    %269 = vector.load %arg3[%c0_66, %c0_67] : memref<1x128xf32, #tpu.memory_space<vmem>>, vector<1x128xf32>
    %270 = vector.broadcast %269 : vector<1x128xf32> to vector<128x128xf32>
    %271 = arith.addf %268, %270 : vector<128x128xf32>
    %cst_68 = arith.constant 5.000000e-01 : f32
    %272 = vector.broadcast %cst_68 : f32 to vector<128x128xf32>
    %273 = arith.mulf %272, %271 : vector<128x128xf32>
    %274 = math.tanh %273 : vector<128x128xf32>
    %cst_69 = arith.constant 5.000000e-01 : f32
    %275 = vector.broadcast %cst_69 : f32 to vector<128x128xf32>
    %276 = arith.mulf %275, %274 : vector<128x128xf32>
    %cst_70 = arith.constant 5.000000e-01 : f32
    %277 = vector.broadcast %cst_70 : f32 to vector<128x128xf32>
    %278 = arith.addf %277, %276 : vector<128x128xf32>
    %279 = arith.mulf %271, %278 : vector<128x128xf32>
    %c0_71 = arith.constant 0 : index
    %c0_72 = arith.constant 0 : index
    %280 = vector.load %arg6[%c0_71, %c0_72] : memref<4x128xf32, #tpu.memory_space<vmem>>, vector<4x128xf32>
    %c0_73 = arith.constant 0 : index
    %c0_74 = arith.constant 0 : index
    %281 = vector.load %arg4[%c0_73, %c0_74] : memref<128x8xf32, #tpu.memory_space<vmem>>, vector<128x8xf32>
    %cst_75 = arith.constant dense<0.000000e+00> : vector<4x128xf32>
    %282 = tpu.matmul %280, %279, %cst_75 {dimension_numbers = #tpu.dot_dimension_numbers<[1], [0], [0], [1], [0, 0, 1, 1], [], []>} : vector<4x128xf32>, vector<128x128xf32>, vector<4x128xf32> -> vector<4x128xf32>
    %283 = arith.mulf %279, %279 : vector<128x128xf32>
    %cst_76 = arith.constant dense<0.000000e+00> : vector<4x128xf32>
    %284 = tpu.matmul %280, %283, %cst_76 {dimension_numbers = #tpu.dot_dimension_numbers<[1], [0], [0], [1], [0, 0, 1, 1], [], []>} : vector<4x128xf32>, vector<128x128xf32>, vector<4x128xf32> -> vector<4x128xf32>
    %cst_77 = arith.constant dense<0.000000e+00> : vector<4x8xf32>
    %285 = tpu.matmul %282, %281, %cst_77 {dimension_numbers = #tpu.dot_dimension_numbers<[1], [0], [0], [1], [0, 0, 1, 1], [], []>} : vector<4x128xf32>, vector<128x8xf32>, vector<4x8xf32> -> vector<4x8xf32>
    %cst_78 = arith.constant dense<0.000000e+00> : vector<4x8xf32>
    %286 = tpu.matmul %284, %281, %cst_78 {dimension_numbers = #tpu.dot_dimension_numbers<[1], [0], [0], [1], [0, 0, 1, 1], [], []>} : vector<4x128xf32>, vector<128x8xf32>, vector<4x8xf32> -> vector<4x8xf32>
    %cst_79 = arith.constant 0.001953125 : f32
    %287 = vector.broadcast %cst_79 : f32 to vector<4x8xf32>
    %288 = arith.mulf %285, %287 : vector<4x8xf32>
    %cst_80 = arith.constant 0.001953125 : f32
    %289 = vector.broadcast %cst_80 : f32 to vector<4x8xf32>
    %290 = arith.mulf %286, %289 : vector<4x8xf32>
    %291 = arith.mulf %288, %288 : vector<4x8xf32>
    %292 = arith.subf %290, %291 : vector<4x8xf32>
    %c0_81 = arith.constant 0 : index
    %c0_82 = arith.constant 0 : index
    %293 = vector.load %arg7[%c0_81, %c0_82] : memref<4x8xf32, #tpu.memory_space<vmem>>, vector<4x8xf32>
    %cst_83 = arith.constant 9.99999974E-6 : f32
    %294 = vector.broadcast %cst_83 : f32 to vector<4x8xf32>
    %295 = arith.addf %292, %294 : vector<4x8xf32>
    %296 = math.rsqrt %295 : vector<4x8xf32>
    %297 = arith.mulf %293, %296 : vector<4x8xf32>
    %c0_84 = arith.constant 0 : index
    %c0_85 = arith.constant 0 : index
    %298 = vector.load %arg5[%c0_84, %c0_85] : memref<8x128xf32, #tpu.memory_space<vmem>>, vector<8x128xf32>
    %cst_86 = arith.constant dense<0.000000e+00> : vector<4x128xf32>
    %299 = tpu.matmul %288, %298, %cst_86 {dimension_numbers = #tpu.dot_dimension_numbers<[1], [0], [0], [1], [0, 0, 1, 1], [], []>} : vector<4x8xf32>, vector<8x128xf32>, vector<4x128xf32> -> vector<4x128xf32>
    %c0_87 = arith.constant 0 : index
    %c0_88 = arith.constant 0 : index
    %300 = vector.load %arg5[%c0_87, %c0_88] : memref<8x128xf32, #tpu.memory_space<vmem>>, vector<8x128xf32>
    %cst_89 = arith.constant dense<0.000000e+00> : vector<4x128xf32>
    %301 = tpu.matmul %297, %300, %cst_89 {dimension_numbers = #tpu.dot_dimension_numbers<[1], [0], [0], [1], [0, 0, 1, 1], [], []>} : vector<4x8xf32>, vector<8x128xf32>, vector<4x128xf32> -> vector<4x128xf32>
    %302 = vector.extract_strided_slice %279 {offsets = [0, 0], sizes = [32, 128], strides = [1, 1]} : vector<128x128xf32> to vector<32x128xf32>
    %303 = vector.extract_strided_slice %299 {offsets = [0, 0], sizes = [1, 128], strides = [1, 1]} : vector<4x128xf32> to vector<1x128xf32>
    %304 = vector.broadcast %303 : vector<1x128xf32> to vector<32x128xf32>
    %305 = arith.subf %302, %304 : vector<32x128xf32>
    %306 = vector.extract_strided_slice %301 {offsets = [0, 0], sizes = [1, 128], strides = [1, 1]} : vector<4x128xf32> to vector<1x128xf32>
    %307 = vector.broadcast %306 : vector<1x128xf32> to vector<32x128xf32>
    %308 = arith.mulf %305, %307 : vector<32x128xf32>
    %c0_90 = arith.constant 0 : index
    %c0_91 = arith.constant 0 : index
    %309 = vector.load %arg8[%c0_90, %c0_91] : memref<128x128xf32, #tpu.memory_space<vmem>>, vector<32x128xf32>
    tpu.vector_store %arg8[%c0_90, %c0_91], %308 {strides = array<i32>} : memref<128x128xf32, #tpu.memory_space<vmem>>, vector<32x128xf32>,
    %310 = vector.extract_strided_slice %279 {offsets = [32, 0], sizes = [32, 128], strides = [1, 1]} : vector<128x128xf32> to vector<32x128xf32>
    %311 = vector.extract_strided_slice %299 {offsets = [1, 0], sizes = [1, 128], strides = [1, 1]} : vector<4x128xf32> to vector<1x128xf32>
    %312 = vector.broadcast %311 : vector<1x128xf32> to vector<32x128xf32>
    %313 = arith.subf %310, %312 : vector<32x128xf32>
    %314 = vector.extract_strided_slice %301 {offsets = [1, 0], sizes = [1, 128], strides = [1, 1]} : vector<4x128xf32> to vector<1x128xf32>
    %315 = vector.broadcast %314 : vector<1x128xf32> to vector<32x128xf32>
    %316 = arith.mulf %313, %315 : vector<32x128xf32>
    %c32_92 = arith.constant 32 : index
    %c0_93 = arith.constant 0 : index
    %317 = vector.load %arg8[%c32_92, %c0_93] : memref<128x128xf32, #tpu.memory_space<vmem>>, vector<32x128xf32>
    tpu.vector_store %arg8[%c32_92, %c0_93], %316 {strides = array<i32>} : memref<128x128xf32, #tpu.memory_space<vmem>>, vector<32x128xf32>,
    %318 = vector.extract_strided_slice %279 {offsets = [64, 0], sizes = [32, 128], strides = [1, 1]} : vector<128x128xf32> to vector<32x128xf32>
    %319 = vector.extract_strided_slice %299 {offsets = [2, 0], sizes = [1, 128], strides = [1, 1]} : vector<4x128xf32> to vector<1x128xf32>
    %320 = vector.broadcast %319 : vector<1x128xf32> to vector<32x128xf32>
    %321 = arith.subf %318, %320 : vector<32x128xf32>
    %322 = vector.extract_strided_slice %301 {offsets = [2, 0], sizes = [1, 128], strides = [1, 1]} : vector<4x128xf32> to vector<1x128xf32>
    %323 = vector.broadcast %322 : vector<1x128xf32> to vector<32x128xf32>
    %324 = arith.mulf %321, %323 : vector<32x128xf32>
    %c64_94 = arith.constant 64 : index
    %c0_95 = arith.constant 0 : index
    %325 = vector.load %arg8[%c64_94, %c0_95] : memref<128x128xf32, #tpu.memory_space<vmem>>, vector<32x128xf32>
    tpu.vector_store %arg8[%c64_94, %c0_95], %324 {strides = array<i32>} : memref<128x128xf32, #tpu.memory_space<vmem>>, vector<32x128xf32>,
    %326 = vector.extract_strided_slice %279 {offsets = [96, 0], sizes = [32, 128], strides = [1, 1]} : vector<128x128xf32> to vector<32x128xf32>
    %327 = vector.extract_strided_slice %299 {offsets = [3, 0], sizes = [1, 128], strides = [1, 1]} : vector<4x128xf32> to vector<1x128xf32>
    %328 = vector.broadcast %327 : vector<1x128xf32> to vector<32x128xf32>
    %329 = arith.subf %326, %328 : vector<32x128xf32>
    %330 = vector.extract_strided_slice %301 {offsets = [3, 0], sizes = [1, 128], strides = [1, 1]} : vector<4x128xf32> to vector<1x128xf32>
    %331 = vector.broadcast %330 : vector<1x128xf32> to vector<32x128xf32>
    %332 = arith.mulf %329, %331 : vector<32x128xf32>
    %c96_96 = arith.constant 96 : index
    %c0_97 = arith.constant 0 : index
    %333 = vector.load %arg8[%c96_96, %c0_97] : memref<128x128xf32, #tpu.memory_space<vmem>>, vector<32x128xf32>
    tpu.vector_store %arg8[%c96_96, %c0_97], %332 {strides = array<i32>} : memref<128x128xf32, #tpu.memory_space<vmem>>, vector<32x128xf32>,
    return
  }
}

</mosaic_0001>

<llo_original>
// kernel: _lambda_.1
$region0: #{_lambda_.1}
  #allocation0 [shape = 'u32[]', space=smem, size = 0x4, offset = 0x4, fixed_abs, tag = 'smem constant byte address 0x4 - core index']
  #allocation1 [shape = 'u32[144,128]{1,0:T(1,128)}', space=vmem, size = 0x12000, scoped, tag = 'internal scratch']
  #allocation2 [shape = 'f32[128,128]{1,0:T(8,128)}', space=vmem, size = 0x10000, scoped, tag = 'scratch operand']
  %s0 = inlined_call_operand.vmem [shape: f32[4,2,18,128], index: 0, kind: input, shape index: {}]
  %s1 = inlined_call_operand.vmem [shape: f32[9,128], index: 1, kind: input, shape index: {}]
  %s2 = inlined_call_operand.vmem [shape: f32[128,128], index: 2, kind: input, shape index: {}]
  %s3 = inlined_call_operand.vmem [shape: f32[1,128], index: 3, kind: input, shape index: {}]
  %s4 = inlined_call_operand.vmem [shape: f32[128,8], index: 4, kind: input, shape index: {}]
  %s5 = inlined_call_operand.vmem [shape: f32[8,128], index: 5, kind: input, shape index: {}]
  %s6 = inlined_call_operand.vmem [shape: f32[4,128], index: 6, kind: input, shape index: {}]
  %s7 = inlined_call_operand.vmem [shape: f32[4,8], index: 7, kind: input, shape index: {}]
  %s8 = inlined_call_operand.vmem [shape: f32[128,128], index: 8, kind: output, shape index: {}]
  %s9 = sld [smem:[#allocation0]]
  $region42: #{_lambda_.1} parent=0
    _
  %s11 = ssub.s32 1, %s9
  %s12 = scalar_select 0, %s11, %s9
  // Predicated region
  $region2: #{_lambda_.1} parent=0 // pred_check
    _
  $region3: #{_lambda_.1} parent=0 // pred_check_branch
    %14 = sbr.rel (0) target = $region5
  $region4: #{_lambda_.1} parent=0 // pred_region
    _
  $region5: #{_lambda_.1} parent=0 // pred_fallthru
    _
  // Predicated region
  $region6: #{_lambda_.1} parent=0 // pred_check
    _
  $region7: #{_lambda_.1} parent=0 // pred_check_branch
    %16 = sbr.rel (0) target = $region9
  $region8: #{_lambda_.1} parent=0 // pred_region
    _
  $region9: #{_lambda_.1} parent=0 // pred_fallthru
    _
  // Predicated region
  $region10: #{_lambda_.1} parent=0 // pred_check
    _
  $region11: #{_lambda_.1} parent=0 // pred_check_branch
    %18 = sbr.rel (0) target = $region13
  $region12: #{_lambda_.1} parent=0 // pred_region
    _
  $region13: #{_lambda_.1} parent=0 // pred_fallthru
    _
  // Predicated region
  $region14: #{_lambda_.1} parent=0 // pred_check
    _
  $region15: #{_lambda_.1} parent=0 // pred_check_branch
    %20 = sbr.rel (0) target = $region17
  $region16: #{_lambda_.1} parent=0 // pred_region
    _
  $region17: #{_lambda_.1} parent=0 // pred_fallthru
    _
  // Predicated region
  $region18: #{_lambda_.1} parent=0 // pred_check
    _
  $region19: #{_lambda_.1} parent=0 // pred_check_branch
    %22 = sbr.rel (0) target = $region21
  $region20: #{_lambda_.1} parent=0 // pred_region
    _
  $region21: #{_lambda_.1} parent=0 // pred_fallthru
    _
  // Predicated region
  $region22: #{_lambda_.1} parent=0 // pred_check
    _
  $region23: #{_lambda_.1} parent=0 // pred_check_branch
    %24 = sbr.rel (0) target = $region25
  $region24: #{_lambda_.1} parent=0 // pred_region
    _
  $region25: #{_lambda_.1} parent=0 // pred_fallthru
    _
  // Predicated region
  $region26: #{_lambda_.1} parent=0 // pred_check
    _
  $region27: #{_lambda_.1} parent=0 // pred_check_branch
    %26 = sbr.rel (0) target = $region29
  $region28: #{_lambda_.1} parent=0 // pred_region
    _
  $region29: #{_lambda_.1} parent=0 // pred_fallthru
    _
  // Predicated region
  $region30: #{_lambda_.1} parent=0 // pred_check
    _
  $region31: #{_lambda_.1} parent=0 // pred_check_branch
    %28 = sbr.rel (0) target = $region33
  $region32: #{_lambda_.1} parent=0 // pred_region
    _
  $region33: #{_lambda_.1} parent=0 // pred_fallthru
    _
  %v29 = vld [vmem:[%s1] sm:$0xff]
  %v30 = vld [vmem:[%s1 + $0x8] sm:$0x1]
  %vm31 = vcmp.gt.f32.partialorder 0.0, 0.5
  %v32 = vsel %vm31, 1, 0
  %v33 = vcvt.s32.f32 %v32
  %v34 = vld [vmem:[%s0] sm:$0xff]
  %v35 = vld [vmem:[%s0 + $0x8] sm:$0xff]
  %v36 = vld [vmem:[%s0 + $0x10] sm:$0x3]
  %v37 = vld [vmem:[%s0 + $0x18] sm:$0xff]
  %v38 = vld [vmem:[%s0 + $0x20] sm:$0xff]
  %v39 = vld [vmem:[%s0 + $0x28] sm:$0x3]
  %v40 = vadd.f32 %v34, 0.0
  %v41 = vadd.f32 %v35, 0.0
  %v42 = vadd.f32 %v36, 0.0
  %v43 = vadd.f32 %v37, 0.0
  %v44 = vadd.f32 %v38, 0.0
  %v45 = vadd.f32 %v39, 0.0
  %v46 = vmul.f32 %v33, 0.5
  %v47 = vsub.f32 %v40, %v46
  %v48 = vsub.f32 %v41, %v46
  %v49 = vsub.f32 %v42, %v46
  %v50 = vsub.f32 %v43, %v46
  %v51 = vsub.f32 %v44, %v46
  %v52 = vsub.f32 %v45, %v46
  %vm53 = vcmp.gt.f32.partialorder %v47, 0.5
  %vm54 = vcmp.gt.f32.partialorder %v48, 0.5
  %vm55 = vcmp.gt.f32.partialorder %v49, 0.5
  %vm56 = vcmp.gt.f32.partialorder %v50, 0.5
  %vm57 = vcmp.gt.f32.partialorder %v51, 0.5
  %vm58 = vcmp.gt.f32.partialorder %v52, 0.5
  %v59 = vsel %vm53, 1, 0
  %v60 = vsel %vm54, 1, 0
  %v61 = vsel %vm55, 1, 0
  %v62 = vsel %vm56, 1, 0
  %v63 = vsel %vm57, 1, 0
  %v64 = vsel %vm58, 1, 0
  %v65 = vcvt.s32.f32 %v59
  %v66 = vcvt.s32.f32 %v60
  %v67 = vcvt.s32.f32 %v61
  %v68 = vcvt.s32.f32 %v62
  %v69 = vcvt.s32.f32 %v63
  %v70 = vcvt.s32.f32 %v64
  %v71 = vmul.f32 %v65, 1.25
  %v72 = vmul.f32 %v66, 1.25
  %v73 = vmul.f32 %v67, 1.25
  %v74 = vmul.f32 %v68, 1.25
  %v75 = vmul.f32 %v69, 1.25
  %v76 = vmul.f32 %v70, 1.25
  %v77 = vlaneseq
  %v78 = vshrl.u32 %v77, 7
  %v79 = vsub.s32 0, %v78
  %v80 = vrot.slane %v29, %v79
  %v81 = vmul.f32 %v71, %v80
  %v82 = vmul.f32 %v72, %v80
  %v83 = vmul.f32 %v74, %v80
  %v84 = vmul.f32 %v75, %v80
  %85 = vrot.lane.b32.xlu0 %v71, 124
  %v86 = vpop.permute.xlu0 %85
  %87 = vrot.lane.b32.xlu0 %v72, 124
  %v88 = vpop.permute.xlu0 %87
  %89 = vrot.lane.b32.xlu0 %v74, 124
  %v90 = vpop.permute.xlu0 %89
  %91 = vrot.lane.b32.xlu0 %v75, 124
  %v92 = vpop.permute.xlu0 %91
  %v93 = vlaneseq
  %v94 = vshrl.u32 %v93, 7
  %v95 = vsub.s32 1, %v94
  %v96 = vrot.slane %v29, %v95
  %v97 = vmul.f32 %v86, %v96
  %v98 = vmul.f32 %v88, %v96
  %v99 = vmul.f32 %v90, %v96
  %v100 = vmul.f32 %v92, %v96
  %v101 = vadd.f32 %v81, %v97
  %v102 = vadd.f32 %v82, %v98
  %v103 = vadd.f32 %v83, %v99
  %v104 = vadd.f32 %v84, %v100
  %105 = vrot.lane.b32.xlu0 %v71, 120
  %v106 = vpop.permute.xlu0 %105
  %107 = vrot.lane.b32.xlu0 %v72, 120
  %v108 = vpop.permute.xlu0 %107
  %109 = vrot.lane.b32.xlu0 %v74, 120
  %v110 = vpop.permute.xlu0 %109
  %111 = vrot.lane.b32.xlu0 %v75, 120
  %v112 = vpop.permute.xlu0 %111
  %v113 = vlaneseq
  %v114 = vshrl.u32 %v113, 7
  %v115 = vsub.s32 2, %v114
  %v116 = vrot.slane %v29, %v115
  %v117 = vmul.f32 %v106, %v116
  %v118 = vmul.f32 %v108, %v116
  %v119 = vmul.f32 %v110, %v116
  %v120 = vmul.f32 %v112, %v116
  %v121 = vadd.f32 %v101, %v117
  %v122 = vadd.f32 %v102, %v118
  %v123 = vadd.f32 %v103, %v119
  %v124 = vadd.f32 %v104, %v120
  %vm131 = vcmask 1046528
  %v132 = vrot.slane %v71, 1
  %v133 = vrot.slane %v72, 1
  %v134 = vsel %vm131, %v132, %v133
  %v135 = vrot.slane %v73, 1
  %v136 = vsel %vm131, %v133, %v135
  %v137 = vrot.slane %v74, 1
  %v138 = vrot.slane %v75, 1
  %v139 = vsel %vm131, %v137, %v138
  %v140 = vrot.slane %v76, 1
  %v141 = vsel %vm131, %v138, %v140
  %v146 = vlaneseq
  %v147 = vshrl.u32 %v146, 7
  %v148 = vsub.s32 3, %v147
  %v149 = vrot.slane %v29, %v148
  %v150 = vmul.f32 %v134, %v149
  %v151 = vmul.f32 %v136, %v149
  %v152 = vmul.f32 %v139, %v149
  %v153 = vmul.f32 %v141, %v149
  %v154 = vadd.f32 %v121, %v150
  %v155 = vadd.f32 %v122, %v151
  %v156 = vadd.f32 %v123, %v152
  %v157 = vadd.f32 %v124, %v153
  %158 = vrot.lane.b32.xlu0 %v134, 124
  %v159 = vpop.permute.xlu0 %158
  %160 = vrot.lane.b32.xlu0 %v136, 124
  %v161 = vpop.permute.xlu0 %160
  %162 = vrot.lane.b32.xlu0 %v139, 124
  %v163 = vpop.permute.xlu0 %162
  %164 = vrot.lane.b32.xlu0 %v141, 124
  %v165 = vpop.permute.xlu0 %164
  %v166 = vlaneseq
  %v167 = vshrl.u32 %v166, 7
  %v168 = vsub.s32 4, %v167
  %v169 = vrot.slane %v29, %v168
  %v170 = vmul.f32 %v159, %v169
  %v171 = vmul.f32 %v161, %v169
  %v172 = vmul.f32 %v163, %v169
  %v173 = vmul.f32 %v165, %v169
  %v174 = vadd.f32 %v154, %v170
  %v175 = vadd.f32 %v155, %v171
  %v176 = vadd.f32 %v156, %v172
  %v177 = vadd.f32 %v157, %v173
  %178 = vrot.lane.b32.xlu0 %v134, 120
  %v179 = vpop.permute.xlu0 %178
  %180 = vrot.lane.b32.xlu0 %v136, 120
  %v181 = vpop.permute.xlu0 %180
  %182 = vrot.lane.b32.xlu0 %v139, 120
  %v183 = vpop.permute.xlu0 %182
  %184 = vrot.lane.b32.xlu0 %v141, 120
  %v185 = vpop.permute.xlu0 %184
  %v186 = vlaneseq
  %v187 = vshrl.u32 %v186, 7
  %v188 = vsub.s32 5, %v187
  %v189 = vrot.slane %v29, %v188
  %v190 = vmul.f32 %v179, %v189
  %v191 = vmul.f32 %v181, %v189
  %v192 = vmul.f32 %v183, %v189
  %v193 = vmul.f32 %v185, %v189
  %v194 = vadd.f32 %v174, %v190
  %v195 = vadd.f32 %v175, %v191
  %v196 = vadd.f32 %v176, %v192
  %v197 = vadd.f32 %v177, %v193
  %vm198 = vcmask 1045504
  %v199 = vrot.slane %v71, 2
  %v200 = vrot.slane %v72, 2
  %v201 = vsel %vm198, %v199, %v200
  %v202 = vrot.slane %v73, 2
  %v203 = vsel %vm198, %v200, %v202
  %v204 = vrot.slane %v74, 2
  %v205 = vrot.slane %v75, 2
  %v206 = vsel %vm198, %v204, %v205
  %v207 = vrot.slane %v76, 2
  %v208 = vsel %vm198, %v205, %v207
  %v213 = vlaneseq
  %v214 = vshrl.u32 %v213, 7
  %v215 = vsub.s32 6, %v214
  %v216 = vrot.slane %v29, %v215
  %v217 = vmul.f32 %v201, %v216
  %v218 = vmul.f32 %v203, %v216
  %v219 = vmul.f32 %v206, %v216
  %v220 = vmul.f32 %v208, %v216
  %v221 = vadd.f32 %v194, %v217
  %v222 = vadd.f32 %v195, %v218
  %v223 = vadd.f32 %v196, %v219
  %v224 = vadd.f32 %v197, %v220
  %225 = vrot.lane.b32.xlu0 %v201, 124
  %v226 = vpop.permute.xlu0 %225
  %227 = vrot.lane.b32.xlu0 %v203, 124
  %v228 = vpop.permute.xlu0 %227
  %229 = vrot.lane.b32.xlu0 %v206, 124
  %v230 = vpop.permute.xlu0 %229
  %231 = vrot.lane.b32.xlu0 %v208, 124
  %v232 = vpop.permute.xlu0 %231
  %v233 = vlaneseq
  %v234 = vshrl.u32 %v233, 7
  %v235 = vsub.s32 7, %v234
  %v236 = vrot.slane %v29, %v235
  %v237 = vmul.f32 %v226, %v236
  %v238 = vmul.f32 %v228, %v236
  %v239 = vmul.f32 %v230, %v236
  %v240 = vmul.f32 %v232, %v236
  %v241 = vadd.f32 %v221, %v237
  %v242 = vadd.f32 %v222, %v238
  %v243 = vadd.f32 %v223, %v239
  %v244 = vadd.f32 %v224, %v240
  %245 = vrot.lane.b32.xlu0 %v201, 120
  %v246 = vpop.permute.xlu0 %245
  %247 = vrot.lane.b32.xlu0 %v203, 120
  %v248 = vpop.permute.xlu0 %247
  %249 = vrot.lane.b32.xlu0 %v206, 120
  %v250 = vpop.permute.xlu0 %249
  %251 = vrot.lane.b32.xlu0 %v208, 120
  %v252 = vpop.permute.xlu0 %251
  %v253 = vlaneseq
  %v254 = vshrl.u32 %v253, 7
  %v255 = vsub.s32 0, %v254
  %v256 = vrot.slane %v30, %v255
  %v257 = vmul.f32 %v246, %v256
  %v258 = vmul.f32 %v248, %v256
  %v259 = vmul.f32 %v250, %v256
  %v260 = vmul.f32 %v252, %v256
  %v261 = vadd.f32 %v241, %v257
  %v262 = vadd.f32 %v242, %v258
  %v263 = vadd.f32 %v243, %v259
  %v264 = vadd.f32 %v244, %v260
  %265 = vst [vmem:[#allocation2] sm:$0xff] %v261
  %266 = vst [vmem:[#allocation2 + $0x8] sm:$0xff] %v262
  %267 = vst [vmem:[#allocation2 + $0x10] sm:$0xff] %v263
  %268 = vst [vmem:[#allocation2 + $0x18] sm:$0xff] %v264
  %v269 = vmul.f32 %v47, 0.8
  %v270 = vmul.f32 %v48, 0.8
  %v271 = vmul.f32 %v49, 0.8
  %v272 = vmul.f32 %v50, 0.8
  %v273 = vmul.f32 %v51, 0.8
  %v274 = vmul.f32 %v52, 0.8
  %s275 = scalar_lea.vmem %s0, 48
  %v276 = vld [vmem:[%s275] sm:$0xff]
  %v277 = vld [vmem:[%s275 + $0x8] sm:$0xff]
  %v278 = vld [vmem:[%s275 + $0x10] sm:$0x3]
  %v279 = vld [vmem:[%s275 + $0x18] sm:$0xff]
  %v280 = vld [vmem:[%s275 + $0x20] sm:$0xff]
  %v281 = vld [vmem:[%s275 + $0x28] sm:$0x3]
  %v282 = vadd.f32 %v269, %v276
  %v283 = vadd.f32 %v270, %v277
  %v284 = vadd.f32 %v271, %v278
  %v285 = vadd.f32 %v272, %v279
  %v286 = vadd.f32 %v273, %v280
  %v287 = vadd.f32 %v274, %v281
  %v288 = vmul.f32 %v65, 0.5
  %v289 = vmul.f32 %v66, 0.5
  %v290 = vmul.f32 %v67, 0.5
  %v291 = vmul.f32 %v68, 0.5
  %v292 = vmul.f32 %v69, 0.5
  %v293 = vmul.f32 %v70, 0.5
  %v294 = vsub.f32 %v282, %v288
  %v295 = vsub.f32 %v283, %v289
  %v296 = vsub.f32 %v284, %v290
  %v297 = vsub.f32 %v285, %v291
  %v298 = vsub.f32 %v286, %v292
  %v299 = vsub.f32 %v287, %v293
  %vm300 = vcmp.gt.f32.partialorder %v294, 0.5
  %vm301 = vcmp.gt.f32.partialorder %v295, 0.5
  %vm302 = vcmp.gt.f32.partialorder %v296, 0.5
  %vm303 = vcmp.gt.f32.partialorder %v297, 0.5
  %vm304 = vcmp.gt.f32.partialorder %v298, 0.5
  %vm305 = vcmp.gt.f32.partialorder %v299, 0.5
  %v306 = vsel %vm300, 1, 0
  %v307 = vsel %vm301, 1, 0
  %v308 = vsel %vm302, 1, 0
  %v309 = vsel %vm303, 1, 0
  %v310 = vsel %vm304, 1, 0
  %v311 = vsel %vm305, 1, 0
  %v312 = vcvt.s32.f32 %v306
  %v313 = vcvt.s32.f32 %v307
  %v314 = vcvt.s32.f32 %v308
  %v315 = vcvt.s32.f32 %v309
  %v316 = vcvt.s32.f32 %v310
  %v317 = vcvt.s32.f32 %v311
  %v318 = vmul.f32 %v312, 1.25
  %v319 = vmul.f32 %v313, 1.25
  %v320 = vmul.f32 %v314, 1.25
  %v321 = vmul.f32 %v315, 1.25
  %v322 = vmul.f32 %v316, 1.25
  %v323 = vmul.f32 %v317, 1.25
  %v324 = vmul.f32 %v318, %v80
  %v325 = vmul.f32 %v319, %v80
  %v326 = vmul.f32 %v321, %v80
  %v327 = vmul.f32 %v322, %v80
  %328 = vrot.lane.b32.xlu0 %v318, 124
  %v329 = vpop.permute.xlu0 %328
  %330 = vrot.lane.b32.xlu0 %v319, 124
  %v331 = vpop.permute.xlu0 %330
  %332 = vrot.lane.b32.xlu0 %v321, 124
  %v333 = vpop.permute.xlu0 %332
  %334 = vrot.lane.b32.xlu0 %v322, 124
  %v335 = vpop.permute.xlu0 %334
  %v336 = vmul.f32 %v329, %v96
  %v337 = vmul.f32 %v331, %v96
  %v338 = vmul.f32 %v333, %v96
  %v339 = vmul.f32 %v335, %v96
  %v340 = vadd.f32 %v324, %v336
  %v341 = vadd.f32 %v325, %v337
  %v342 = vadd.f32 %v326, %v338
  %v343 = vadd.f32 %v327, %v339
  %344 = vrot.lane.b32.xlu0 %v318, 120
  %v345 = vpop.permute.xlu0 %344
  %346 = vrot.lane.b32.xlu0 %v319, 120
  %v347 = vpop.permute.xlu0 %346
  %348 = vrot.lane.b32.xlu0 %v321, 120
  %v349 = vpop.permute.xlu0 %348
  %350 = vrot.lane.b32.xlu0 %v322, 120
  %v351 = vpop.permute.xlu0 %350
  %v352 = vmul.f32 %v345, %v116
  %v353 = vmul.f32 %v347, %v116
  %v354 = vmul.f32 %v349, %v116
  %v355 = vmul.f32 %v351, %v116
  %v356 = vadd.f32 %v340, %v352
  %v357 = vadd.f32 %v341, %v353
  %v358 = vadd.f32 %v342, %v354
  %v359 = vadd.f32 %v343, %v355
  %v366 = vrot.slane %v318, 1
  %v367 = vrot.slane %v319, 1
  %v368 = vsel %vm131, %v366, %v367
  %v369 = vrot.slane %v320, 1
  %v370 = vsel %vm131, %v367, %v369
  %v371 = vrot.slane %v321, 1
  %v372 = vrot.slane %v322, 1
  %v373 = vsel %vm131, %v371, %v372
  %v374 = vrot.slane %v323, 1
  %v375 = vsel %vm131, %v372, %v374
  %v380 = vmul.f32 %v368, %v149
  %v381 = vmul.f32 %v370, %v149
  %v382 = vmul.f32 %v373, %v149
  %v383 = vmul.f32 %v375, %v149
  %v384 = vadd.f32 %v356, %v380
  %v385 = vadd.f32 %v357, %v381
  %v386 = vadd.f32 %v358, %v382
  %v387 = vadd.f32 %v359, %v383
  %388 = vrot.lane.b32.xlu0 %v368, 124
  %v389 = vpop.permute.xlu0 %388
  %390 = vrot.lane.b32.xlu0 %v370, 124
  %v391 = vpop.permute.xlu0 %390
  %392 = vrot.lane.b32.xlu0 %v373, 124
  %v393 = vpop.permute.xlu0 %392
  %394 = vrot.lane.b32.xlu0 %v375, 124
  %v395 = vpop.permute.xlu0 %394
  %v396 = vmul.f32 %v389, %v169
  %v397 = vmul.f32 %v391, %v169
  %v398 = vmul.f32 %v393, %v169
  %v399 = vmul.f32 %v395, %v169
  %v400 = vadd.f32 %v384, %v396
  %v401 = vadd.f32 %v385, %v397
  %v402 = vadd.f32 %v386, %v398
  %v403 = vadd.f32 %v387, %v399
  %404 = vrot.lane.b32.xlu0 %v368, 120
  %v405 = vpop.permute.xlu0 %404
  %406 = vrot.lane.b32.xlu0 %v370, 120
  %v407 = vpop.permute.xlu0 %406
  %408 = vrot.lane.b32.xlu0 %v373, 120
  %v409 = vpop.permute.xlu0 %408
  %410 = vrot.lane.b32.xlu0 %v375, 120
  %v411 = vpop.permute.xlu0 %410
  %v412 = vmul.f32 %v405, %v189
  %v413 = vmul.f32 %v407, %v189
  %v414 = vmul.f32 %v409, %v189
  %v415 = vmul.f32 %v411, %v189
  %v416 = vadd.f32 %v400, %v412
  %v417 = vadd.f32 %v401, %v413
  %v418 = vadd.f32 %v402, %v414
  %v419 = vadd.f32 %v403, %v415
  %v420 = vrot.slane %v318, 2
  %v421 = vrot.slane %v319, 2
  %v422 = vsel %vm198, %v420, %v421
  %v423 = vrot.slane %v320, 2
  %v424 = vsel %vm198, %v421, %v423
  %v425 = vrot.slane %v321, 2
  %v426 = vrot.slane %v322, 2
  %v427 = vsel %vm198, %v425, %v426
  %v428 = vrot.slane %v323, 2
  %v429 = vsel %vm198, %v426, %v428
  %v434 = vmul.f32 %v422, %v216
  %v435 = vmul.f32 %v424, %v216
  %v436 = vmul.f32 %v427, %v216
  %v437 = vmul.f32 %v429, %v216
  %v438 = vadd.f32 %v416, %v434
  %v439 = vadd.f32 %v417, %v435
  %v440 = vadd.f32 %v418, %v436
  %v441 = vadd.f32 %v419, %v437
  %442 = vrot.lane.b32.xlu0 %v422, 124
  %v443 = vpop.permute.xlu0 %442
  %444 = vrot.lane.b32.xlu0 %v424, 124
  %v445 = vpop.permute.xlu0 %444
  %446 = vrot.lane.b32.xlu0 %v427, 124
  %v447 = vpop.permute.xlu0 %446
  %448 = vrot.lane.b32.xlu0 %v429, 124
  %v449 = vpop.permute.xlu0 %448
  %v450 = vmul.f32 %v443, %v236
  %v451 = vmul.f32 %v445, %v236
  %v452 = vmul.f32 %v447, %v236
  %v453 = vmul.f32 %v449, %v236
  %v454 = vadd.f32 %v438, %v450
  %v455 = vadd.f32 %v439, %v451
  %v456 = vadd.f32 %v440, %v452
  %v457 = vadd.f32 %v441, %v453
  %458 = vrot.lane.b32.xlu0 %v422, 120
  %v459 = vpop.permute.xlu0 %458
  %460 = vrot.lane.b32.xlu0 %v424, 120
  %v461 = vpop.permute.xlu0 %460
  %462 = vrot.lane.b32.xlu0 %v427, 120
  %v463 = vpop.permute.xlu0 %462
  %464 = vrot.lane.b32.xlu0 %v429, 120
  %v465 = vpop.permute.xlu0 %464
  %v466 = vmul.f32 %v459, %v256
  %v467 = vmul.f32 %v461, %v256
  %v468 = vmul.f32 %v463, %v256
  %v469 = vmul.f32 %v465, %v256
  %v470 = vadd.f32 %v454, %v466
  %v471 = vadd.f32 %v455, %v467
  %v472 = vadd.f32 %v456, %v468
  %v473 = vadd.f32 %v457, %v469
  %474 = vst [vmem:[#allocation2 + $0x20] sm:$0xff] %v470
  %475 = vst [vmem:[#allocation2 + $0x28] sm:$0xff] %v471
  %476 = vst [vmem:[#allocation2 + $0x30] sm:$0xff] %v472
  %477 = vst [vmem:[#allocation2 + $0x38] sm:$0xff] %v473
  %v478 = vmul.f32 %v294, 0.8
  %v479 = vmul.f32 %v295, 0.8
  %v480 = vmul.f32 %v296, 0.8
  %v481 = vmul.f32 %v297, 0.8
  %v482 = vmul.f32 %v298, 0.8
  %v483 = vmul.f32 %v299, 0.8
  %s484 = scalar_lea.vmem %s0, 96
  %v485 = vld [vmem:[%s484] sm:$0xff]
  %v486 = vld [vmem:[%s484 + $0x8] sm:$0xff]
  %v487 = vld [vmem:[%s484 + $0x10] sm:$0x3]
  %v488 = vld [vmem:[%s484 + $0x18] sm:$0xff]
  %v489 = vld [vmem:[%s484 + $0x20] sm:$0xff]
  %v490 = vld [vmem:[%s484 + $0x28] sm:$0x3]
  %v491 = vadd.f32 %v478, %v485
  %v492 = vadd.f32 %v479, %v486
  %v493 = vadd.f32 %v480, %v487
  %v494 = vadd.f32 %v481, %v488
  %v495 = vadd.f32 %v482, %v489
  %v496 = vadd.f32 %v483, %v490
  %v497 = vmul.f32 %v312, 0.5
  %v498 = vmul.f32 %v313, 0.5
  %v499 = vmul.f32 %v314, 0.5
  %v500 = vmul.f32 %v315, 0.5
  %v501 = vmul.f32 %v316, 0.5
  %v502 = vmul.f32 %v317, 0.5
  %v503 = vsub.f32 %v491, %v497
  %v504 = vsub.f32 %v492, %v498
  %v505 = vsub.f32 %v493, %v499
  %v506 = vsub.f32 %v494, %v500
  %v507 = vsub.f32 %v495, %v501
  %v508 = vsub.f32 %v496, %v502
  %vm509 = vcmp.gt.f32.partialorder %v503, 0.5
  %vm510 = vcmp.gt.f32.partialorder %v504, 0.5
  %vm511 = vcmp.gt.f32.partialorder %v505, 0.5
  %vm512 = vcmp.gt.f32.partialorder %v506, 0.5
  %vm513 = vcmp.gt.f32.partialorder %v507, 0.5
  %vm514 = vcmp.gt.f32.partialorder %v508, 0.5
  %v515 = vsel %vm509, 1, 0
  %v516 = vsel %vm510, 1, 0
  %v517 = vsel %vm511, 1, 0
  %v518 = vsel %vm512, 1, 0
  %v519 = vsel %vm513, 1, 0
  %v520 = vsel %vm514, 1, 0
  %v521 = vcvt.s32.f32 %v515
  %v522 = vcvt.s32.f32 %v516
  %v523 = vcvt.s32.f32 %v517
  %v524 = vcvt.s32.f32 %v518
  %v525 = vcvt.s32.f32 %v519
  %v526 = vcvt.s32.f32 %v520
  %v527 = vmul.f32 %v521, 1.25
  %v528 = vmul.f32 %v522, 1.25
  %v529 = vmul.f32 %v523, 1.25
  %v530 = vmul.f32 %v524, 1.25
  %v531 = vmul.f32 %v525, 1.25
  %v532 = vmul.f32 %v526, 1.25
  %v533 = vmul.f32 %v527, %v80
  %v534 = vmul.f32 %v528, %v80
  %v535 = vmul.f32 %v530, %v80
  %v536 = vmul.f32 %v531, %v80
  %537 = vrot.lane.b32.xlu0 %v527, 124
  %v538 = vpop.permute.xlu0 %537
  %539 = vrot.lane.b32.xlu0 %v528, 124
  %v540 = vpop.permute.xlu0 %539
  %541 = vrot.lane.b32.xlu0 %v530, 124
  %v542 = vpop.permute.xlu0 %541
  %543 = vrot.lane.b32.xlu0 %v531, 124
  %v544 = vpop.permute.xlu0 %543
  %v545 = vmul.f32 %v538, %v96
  %v546 = vmul.f32 %v540, %v96
  %v547 = vmul.f32 %v542, %v96
  %v548 = vmul.f32 %v544, %v96
  %v549 = vadd.f32 %v533, %v545
  %v550 = vadd.f32 %v534, %v546
  %v551 = vadd.f32 %v535, %v547
  %v552 = vadd.f32 %v536, %v548
  %553 = vrot.lane.b32.xlu0 %v527, 120
  %v554 = vpop.permute.xlu0 %553
  %555 = vrot.lane.b32.xlu0 %v528, 120
  %v556 = vpop.permute.xlu0 %555
  %557 = vrot.lane.b32.xlu0 %v530, 120
  %v558 = vpop.permute.xlu0 %557
  %559 = vrot.lane.b32.xlu0 %v531, 120
  %v560 = vpop.permute.xlu0 %559
  %v561 = vmul.f32 %v554, %v116
  %v562 = vmul.f32 %v556, %v116
  %v563 = vmul.f32 %v558, %v116
  %v564 = vmul.f32 %v560, %v116
  %v565 = vadd.f32 %v549, %v561
  %v566 = vadd.f32 %v550, %v562
  %v567 = vadd.f32 %v551, %v563
  %v568 = vadd.f32 %v552, %v564
  %v575 = vrot.slane %v527, 1
  %v576 = vrot.slane %v528, 1
  %v577 = vsel %vm131, %v575, %v576
  %v578 = vrot.slane %v529, 1
  %v579 = vsel %vm131, %v576, %v578
  %v580 = vrot.slane %v530, 1
  %v581 = vrot.slane %v531, 1
  %v582 = vsel %vm131, %v580, %v581
  %v583 = vrot.slane %v532, 1
  %v584 = vsel %vm131, %v581, %v583
  %v589 = vmul.f32 %v577, %v149
  %v590 = vmul.f32 %v579, %v149
  %v591 = vmul.f32 %v582, %v149
  %v592 = vmul.f32 %v584, %v149
  %v593 = vadd.f32 %v565, %v589
  %v594 = vadd.f32 %v566, %v590
  %v595 = vadd.f32 %v567, %v591
  %v596 = vadd.f32 %v568, %v592
  %597 = vrot.lane.b32.xlu0 %v577, 124
  %v598 = vpop.permute.xlu0 %597
  %599 = vrot.lane.b32.xlu0 %v579, 124
  %v600 = vpop.permute.xlu0 %599
  %601 = vrot.lane.b32.xlu0 %v582, 124
  %v602 = vpop.permute.xlu0 %601
  %603 = vrot.lane.b32.xlu0 %v584, 124
  %v604 = vpop.permute.xlu0 %603
  %v605 = vmul.f32 %v598, %v169
  %v606 = vmul.f32 %v600, %v169
  %v607 = vmul.f32 %v602, %v169
  %v608 = vmul.f32 %v604, %v169
  %v609 = vadd.f32 %v593, %v605
  %v610 = vadd.f32 %v594, %v606
  %v611 = vadd.f32 %v595, %v607
  %v612 = vadd.f32 %v596, %v608
  %613 = vrot.lane.b32.xlu0 %v577, 120
  %v614 = vpop.permute.xlu0 %613
  %615 = vrot.lane.b32.xlu0 %v579, 120
  %v616 = vpop.permute.xlu0 %615
  %617 = vrot.lane.b32.xlu0 %v582, 120
  %v618 = vpop.permute.xlu0 %617
  %619 = vrot.lane.b32.xlu0 %v584, 120
  %v620 = vpop.permute.xlu0 %619
  %v621 = vmul.f32 %v614, %v189
  %v622 = vmul.f32 %v616, %v189
  %v623 = vmul.f32 %v618, %v189
  %v624 = vmul.f32 %v620, %v189
  %v625 = vadd.f32 %v609, %v621
  %v626 = vadd.f32 %v610, %v622
  %v627 = vadd.f32 %v611, %v623
  %v628 = vadd.f32 %v612, %v624
  %v629 = vrot.slane %v527, 2
  %v630 = vrot.slane %v528, 2
  %v631 = vsel %vm198, %v629, %v630
  %v632 = vrot.slane %v529, 2
  %v633 = vsel %vm198, %v630, %v632
  %v634 = vrot.slane %v530, 2
  %v635 = vrot.slane %v531, 2
  %v636 = vsel %vm198, %v634, %v635
  %v637 = vrot.slane %v532, 2
  %v638 = vsel %vm198, %v635, %v637
  %v643 = vmul.f32 %v631, %v216
  %v644 = vmul.f32 %v633, %v216
  %v645 = vmul.f32 %v636, %v216
  %v646 = vmul.f32 %v638, %v216
  %v647 = vadd.f32 %v625, %v643
  %v648 = vadd.f32 %v626, %v644
  %v649 = vadd.f32 %v627, %v645
  %v650 = vadd.f32 %v628, %v646
  %651 = vrot.lane.b32.xlu0 %v631, 124
  %v652 = vpop.permute.xlu0 %651
  %653 = vrot.lane.b32.xlu0 %v633, 124
  %v654 = vpop.permute.xlu0 %653
  %655 = vrot.lane.b32.xlu0 %v636, 124
  %v656 = vpop.permute.xlu0 %655
  %657 = vrot.lane.b32.xlu0 %v638, 124
  %v658 = vpop.permute.xlu0 %657
  %v659 = vmul.f32 %v652, %v236
  %v660 = vmul.f32 %v654, %v236
  %v661 = vmul.f32 %v656, %v236
  %v662 = vmul.f32 %v658, %v236
  %v663 = vadd.f32 %v647, %v659
  %v664 = vadd.f32 %v648, %v660
  %v665 = vadd.f32 %v649, %v661
  %v666 = vadd.f32 %v650, %v662
  %667 = vrot.lane.b32.xlu0 %v631, 120
  %v668 = vpop.permute.xlu0 %667
  %669 = vrot.lane.b32.xlu0 %v633, 120
  %v670 = vpop.permute.xlu0 %669
  %671 = vrot.lane.b32.xlu0 %v636, 120
  %v672 = vpop.permute.xlu0 %671
  %673 = vrot.lane.b32.xlu0 %v638, 120
  %v674 = vpop.permute.xlu0 %673
  %v675 = vmul.f32 %v668, %v256
  %v676 = vmul.f32 %v670, %v256
  %v677 = vmul.f32 %v672, %v256
  %v678 = vmul.f32 %v674, %v256
  %v679 = vadd.f32 %v663, %v675
  %v680 = vadd.f32 %v664, %v676
  %v681 = vadd.f32 %v665, %v677
  %v682 = vadd.f32 %v666, %v678
  %683 = vst [vmem:[#allocation2 + $0x40] sm:$0xff] %v679
  %684 = vst [vmem:[#allocation2 + $0x48] sm:$0xff] %v680
  %685 = vst [vmem:[#allocation2 + $0x50] sm:$0xff] %v681
  %686 = vst [vmem:[#allocation2 + $0x58] sm:$0xff] %v682
  %v687 = vmul.f32 %v503, 0.8
  %v688 = vmul.f32 %v504, 0.8
  %v689 = vmul.f32 %v505, 0.8
  %v690 = vmul.f32 %v506, 0.8
  %v691 = vmul.f32 %v507, 0.8
  %v692 = vmul.f32 %v508, 0.8
  %s693 = scalar_lea.vmem %s0, 144
  %v694 = vld [vmem:[%s693] sm:$0xff]
  %v695 = vld [vmem:[%s693 + $0x8] sm:$0xff]
  %v696 = vld [vmem:[%s693 + $0x10] sm:$0x3]
  %v697 = vld [vmem:[%s693 + $0x18] sm:$0xff]
  %v698 = vld [vmem:[%s693 + $0x20] sm:$0xff]
  %v699 = vld [vmem:[%s693 + $0x28] sm:$0x3]
  %v700 = vadd.f32 %v687, %v694
  %v701 = vadd.f32 %v688, %v695
  %v702 = vadd.f32 %v689, %v696
  %v703 = vadd.f32 %v690, %v697
  %v704 = vadd.f32 %v691, %v698
  %v705 = vadd.f32 %v692, %v699
  %v706 = vmul.f32 %v521, 0.5
  %v707 = vmul.f32 %v522, 0.5
  %v708 = vmul.f32 %v523, 0.5
  %v709 = vmul.f32 %v524, 0.5
  %v710 = vmul.f32 %v525, 0.5
  %v711 = vmul.f32 %v526, 0.5
  %v712 = vsub.f32 %v700, %v706
  %v713 = vsub.f32 %v701, %v707
  %v714 = vsub.f32 %v702, %v708
  %v715 = vsub.f32 %v703, %v709
  %v716 = vsub.f32 %v704, %v710
  %v717 = vsub.f32 %v705, %v711
  %vm718 = vcmp.gt.f32.partialorder %v712, 0.5
  %vm719 = vcmp.gt.f32.partialorder %v713, 0.5
  %vm720 = vcmp.gt.f32.partialorder %v714, 0.5
  %vm721 = vcmp.gt.f32.partialorder %v715, 0.5
  %vm722 = vcmp.gt.f32.partialorder %v716, 0.5
  %vm723 = vcmp.gt.f32.partialorder %v717, 0.5
  %v724 = vsel %vm718, 1, 0
  %v725 = vsel %vm719, 1, 0
  %v726 = vsel %vm720, 1, 0
  %v727 = vsel %vm721, 1, 0
  %v728 = vsel %vm722, 1, 0
  %v729 = vsel %vm723, 1, 0
  %v730 = vcvt.s32.f32 %v724
  %v731 = vcvt.s32.f32 %v725
  %v732 = vcvt.s32.f32 %v726
  %v733 = vcvt.s32.f32 %v727
  %v734 = vcvt.s32.f32 %v728
  %v735 = vcvt.s32.f32 %v729
  %v736 = vmul.f32 %v730, 1.25
  %v737 = vmul.f32 %v731, 1.25
  %v738 = vmul.f32 %v732, 1.25
  %v739 = vmul.f32 %v733, 1.25
  %v740 = vmul.f32 %v734, 1.25
  %v741 = vmul.f32 %v735, 1.25
  %v742 = vmul.f32 %v736, %v80
  %v743 = vmul.f32 %v737, %v80
  %v744 = vmul.f32 %v739, %v80
  %v745 = vmul.f32 %v740, %v80
  %746 = vrot.lane.b32.xlu0 %v736, 124
  %v747 = vpop.permute.xlu0 %746
  %748 = vrot.lane.b32.xlu0 %v737, 124
  %v749 = vpop.permute.xlu0 %748
  %750 = vrot.lane.b32.xlu0 %v739, 124
  %v751 = vpop.permute.xlu0 %750
  %752 = vrot.lane.b32.xlu0 %v740, 124
  %v753 = vpop.permute.xlu0 %752
  %v754 = vmul.f32 %v747, %v96
  %v755 = vmul.f32 %v749, %v96
  %v756 = vmul.f32 %v751, %v96
  %v757 = vmul.f32 %v753, %v96
  %v758 = vadd.f32 %v742, %v754
  %v759 = vadd.f32 %v743, %v755
  %v760 = vadd.f32 %v744, %v756
  %v761 = vadd.f32 %v745, %v757
  %762 = vrot.lane.b32.xlu0 %v736, 120
  %v763 = vpop.permute.xlu0 %762
  %764 = vrot.lane.b32.xlu0 %v737, 120
  %v765 = vpop.permute.xlu0 %764
  %766 = vrot.lane.b32.xlu0 %v739, 120
  %v767 = vpop.permute.xlu0 %766
  %768 = vrot.lane.b32.xlu0 %v740, 120
  %v769 = vpop.permute.xlu0 %768
  %v770 = vmul.f32 %v763, %v116
  %v771 = vmul.f32 %v765, %v116
  %v772 = vmul.f32 %v767, %v116
  %v773 = vmul.f32 %v769, %v116
  %v774 = vadd.f32 %v758, %v770
  %v775 = vadd.f32 %v759, %v771
  %v776 = vadd.f32 %v760, %v772
  %v777 = vadd.f32 %v761, %v773
  %v784 = vrot.slane %v736, 1
  %v785 = vrot.slane %v737, 1
  %v786 = vsel %vm131, %v784, %v785
  %v787 = vrot.slane %v738, 1
  %v788 = vsel %vm131, %v785, %v787
  %v789 = vrot.slane %v739, 1
  %v790 = vrot.slane %v740, 1
  %v791 = vsel %vm131, %v789, %v790
  %v792 = vrot.slane %v741, 1
  %v793 = vsel %vm131, %v790, %v792
  %v798 = vmul.f32 %v786, %v149
  %v799 = vmul.f32 %v788, %v149
  %v800 = vmul.f32 %v791, %v149
  %v801 = vmul.f32 %v793, %v149
  %v802 = vadd.f32 %v774, %v798
  %v803 = vadd.f32 %v775, %v799
  %v804 = vadd.f32 %v776, %v800
  %v805 = vadd.f32 %v777, %v801
  %806 = vrot.lane.b32.xlu0 %v786, 124
  %v807 = vpop.permute.xlu0 %806
  %808 = vrot.lane.b32.xlu0 %v788, 124
  %v809 = vpop.permute.xlu0 %808
  %810 = vrot.lane.b32.xlu0 %v791, 124
  %v811 = vpop.permute.xlu0 %810
  %812 = vrot.lane.b32.xlu0 %v793, 124
  %v813 = vpop.permute.xlu0 %812
  %v814 = vmul.f32 %v807, %v169
  %v815 = vmul.f32 %v809, %v169
  %v816 = vmul.f32 %v811, %v169
  %v817 = vmul.f32 %v813, %v169
  %v818 = vadd.f32 %v802, %v814
  %v819 = vadd.f32 %v803, %v815
  %v820 = vadd.f32 %v804, %v816
  %v821 = vadd.f32 %v805, %v817
  %822 = vrot.lane.b32.xlu0 %v786, 120
  %v823 = vpop.permute.xlu0 %822
  %824 = vrot.lane.b32.xlu0 %v788, 120
  %v825 = vpop.permute.xlu0 %824
  %826 = vrot.lane.b32.xlu0 %v791, 120
  %v827 = vpop.permute.xlu0 %826
  %828 = vrot.lane.b32.xlu0 %v793, 120
  %v829 = vpop.permute.xlu0 %828
  %v830 = vmul.f32 %v823, %v189
  %v831 = vmul.f32 %v825, %v189
  %v832 = vmul.f32 %v827, %v189
  %v833 = vmul.f32 %v829, %v189
  %v834 = vadd.f32 %v818, %v830
  %v835 = vadd.f32 %v819, %v831
  %v836 = vadd.f32 %v820, %v832
  %v837 = vadd.f32 %v821, %v833
  %v838 = vrot.slane %v736, 2
  %v839 = vrot.slane %v737, 2
  %v840 = vsel %vm198, %v838, %v839
  %v841 = vrot.slane %v738, 2
  %v842 = vsel %vm198, %v839, %v841
  %v843 = vrot.slane %v739, 2
  %v844 = vrot.slane %v740, 2
  %v845 = vsel %vm198, %v843, %v844
  %v846 = vrot.slane %v741, 2
  %v847 = vsel %vm198, %v844, %v846
  %v852 = vmul.f32 %v840, %v216
  %v853 = vmul.f32 %v842, %v216
  %v854 = vmul.f32 %v845, %v216
  %v855 = vmul.f32 %v847, %v216
  %v856 = vadd.f32 %v834, %v852
  %v857 = vadd.f32 %v835, %v853
  %v858 = vadd.f32 %v836, %v854
  %v859 = vadd.f32 %v837, %v855
  %860 = vrot.lane.b32.xlu0 %v840, 124
  %v861 = vpop.permute.xlu0 %860
  %862 = vrot.lane.b32.xlu0 %v842, 124
  %v863 = vpop.permute.xlu0 %862
  %864 = vrot.lane.b32.xlu0 %v845, 124
  %v865 = vpop.permute.xlu0 %864
  %866 = vrot.lane.b32.xlu0 %v847, 124
  %v867 = vpop.permute.xlu0 %866
  %v868 = vmul.f32 %v861, %v236
  %v869 = vmul.f32 %v863, %v236
  %v870 = vmul.f32 %v865, %v236
  %v871 = vmul.f32 %v867, %v236
  %v872 = vadd.f32 %v856, %v868
  %v873 = vadd.f32 %v857, %v869
  %v874 = vadd.f32 %v858, %v870
  %v875 = vadd.f32 %v859, %v871
  %876 = vrot.lane.b32.xlu0 %v840, 120
  %v877 = vpop.permute.xlu0 %876
  %878 = vrot.lane.b32.xlu0 %v842, 120
  %v879 = vpop.permute.xlu0 %878
  %880 = vrot.lane.b32.xlu0 %v845, 120
  %v881 = vpop.permute.xlu0 %880
  %882 = vrot.lane.b32.xlu0 %v847, 120
  %v883 = vpop.permute.xlu0 %882
  %v884 = vmul.f32 %v877, %v256
  %v885 = vmul.f32 %v879, %v256
  %v886 = vmul.f32 %v881, %v256
  %v887 = vmul.f32 %v883, %v256
  %v888 = vadd.f32 %v872, %v884
  %v889 = vadd.f32 %v873, %v885
  %v890 = vadd.f32 %v874, %v886
  %v891 = vadd.f32 %v875, %v887
  %892 = vst [vmem:[#allocation2 + $0x60] sm:$0xff] %v888
  %893 = vst [vmem:[#allocation2 + $0x68] sm:$0xff] %v889
  %894 = vst [vmem:[#allocation2 + $0x70] sm:$0xff] %v890
  %895 = vst [vmem:[#allocation2 + $0x78] sm:$0xff] %v891
  %v896 = vld [vmem:[#allocation2] sm:$0xff]
  %v897 = vld [vmem:[#allocation2 + $0x8] sm:$0xff]
  %v898 = vld [vmem:[#allocation2 + $0x10] sm:$0xff]
  %v899 = vld [vmem:[#allocation2 + $0x18] sm:$0xff]
  %v900 = vld [vmem:[#allocation2 + $0x20] sm:$0xff]
  %v901 = vld [vmem:[#allocation2 + $0x28] sm:$0xff]
  %v902 = vld [vmem:[#allocation2 + $0x30] sm:$0xff]
  %v903 = vld [vmem:[#allocation2 + $0x38] sm:$0xff]
  %v904 = vld [vmem:[#allocation2 + $0x40] sm:$0xff]
  %v905 = vld [vmem:[#allocation2 + $0x48] sm:$0xff]
  %v906 = vld [vmem:[#allocation2 + $0x50] sm:$0xff]
  %v907 = vld [vmem:[#allocation2 + $0x58] sm:$0xff]
  %v908 = vld [vmem:[#allocation2 + $0x60] sm:$0xff]
  %v909 = vld [vmem:[#allocation2 + $0x68] sm:$0xff]
  %v910 = vld [vmem:[#allocation2 + $0x70] sm:$0xff]
  %v911 = vld [vmem:[#allocation2 + $0x78] sm:$0xff]
  %v912 = vld [vmem:[%s2] sm:$0xff]
  %v913 = vld [vmem:[%s2 + $0x8] sm:$0xff]
  %v914 = vld [vmem:[%s2 + $0x10] sm:$0xff]
  %v915 = vld [vmem:[%s2 + $0x18] sm:$0xff]
  %v916 = vld [vmem:[%s2 + $0x20] sm:$0xff]
  %v917 = vld [vmem:[%s2 + $0x28] sm:$0xff]
  %v918 = vld [vmem:[%s2 + $0x30] sm:$0xff]
  %v919 = vld [vmem:[%s2 + $0x38] sm:$0xff]
  %v920 = vld [vmem:[%s2 + $0x40] sm:$0xff]
  %v921 = vld [vmem:[%s2 + $0x48] sm:$0xff]
  %v922 = vld [vmem:[%s2 + $0x50] sm:$0xff]
  %v923 = vld [vmem:[%s2 + $0x58] sm:$0xff]
  %v924 = vld [vmem:[%s2 + $0x60] sm:$0xff]
  %v925 = vld [vmem:[%s2 + $0x68] sm:$0xff]
  %v926 = vld [vmem:[%s2 + $0x70] sm:$0xff]
  %v927 = vld [vmem:[%s2 + $0x78] sm:$0xff]
  %v928 = vld [vmem:[%s3] sm:$0x1]
  %v930 = vlaneseq
  %v931 = vshrl.u32 %v930, 7
  %v932 = vsub.s32 0, %v931
  %v933 = vrot.slane %v928, %v932
  %935 = vmatprep.subr.mxu0 0.0
  %936 = vmatpush1.msra.mxu0 %v912
  %937 = vmatprep.subr.mxu0 0.0
  %938 = vmatpush1.msra.mxu0 %v913
  %939 = vmatprep.subr.mxu0 0.0
  %940 = vmatpush1.msra.mxu0 %v914
  %941 = vmatprep.subr.mxu0 0.0
  %942 = vmatpush1.msra.mxu0 %v915
  %943 = vmatprep.subr.mxu0 0.0
  %944 = vmatpush1.msra.mxu0 %v916
  %945 = vmatprep.subr.mxu0 0.0
  %946 = vmatpush1.msra.mxu0 %v917
  %947 = vmatprep.subr.mxu0 0.0
  %948 = vmatpush1.msra.mxu0 %v918
  %949 = vmatprep.subr.mxu0 0.0
  %950 = vmatpush1.msra.mxu0 %v919
  %951 = vmatprep.subr.mxu0 0.0
  %952 = vmatpush1.msra.mxu0 %v920
  %953 = vmatprep.subr.mxu0 0.0
  %954 = vmatpush1.msra.mxu0 %v921
  %955 = vmatprep.subr.mxu0 0.0
  %956 = vmatpush1.msra.mxu0 %v922
  %957 = vmatprep.subr.mxu0 0.0
  %958 = vmatpush1.msra.mxu0 %v923
  %959 = vmatprep.subr.mxu0 0.0
  %960 = vmatpush1.msra.mxu0 %v924
  %961 = vmatprep.subr.mxu0 0.0
  %962 = vmatpush1.msra.mxu0 %v925
  %963 = vmatprep.subr.mxu0 0.0
  %964 = vmatpush1.msra.mxu0 %v926
  %965 = vmatprep.subr.mxu0 0.0
  %966 = vmatpush1.msra.mxu0 %v927
  %967 = vmatprep.subr.mxu0 0.0
  %968 = vmatpush1.msra.mxu0 0.0
  %969 = vmatprep.subr.mxu0 0.0
  %970 = vmatpush1.msra.mxu0 0.0
  %971 = vmatprep.subr.mxu0 0.0
  %972 = vmatpush1.msra.mxu0 0.0
  %973 = vmatprep.subr.mxu0 0.0
  %974 = vmatpush1.msra.mxu0 0.0
  %975 = vmatprep.subr.mxu0 0.0
  %976 = vmatpush1.msra.mxu0 0.0
  %977 = vmatprep.subr.mxu0 0.0
  %978 = vmatpush1.msra.mxu0 0.0
  %979 = vmatprep.subr.mxu0 0.0
  %980 = vmatpush1.msra.mxu0 0.0
  %981 = vmatprep.subr.mxu0 0.0
  %982 = vmatpush1.msra.mxu0 0.0
  %983 = vmatprep.subr.mxu0 0.0
  %984 = vmatpush1.msra.mxu0 0.0
  %985 = vmatprep.subr.mxu0 0.0
  %986 = vmatpush1.msra.mxu0 0.0
  %987 = vmatprep.subr.mxu0 0.0
  %988 = vmatpush1.msra.mxu0 0.0
  %989 = vmatprep.subr.mxu0 0.0
  %990 = vmatpush1.msra.mxu0 0.0
  %991 = vmatprep.subr.mxu0 0.0
  %992 = vmatpush1.msra.mxu0 0.0
  %993 = vmatprep.subr.mxu0 0.0
  %994 = vmatpush1.msra.mxu0 0.0
  %995 = vmatprep.subr.mxu0 0.0
  %996 = vmatpush1.msra.mxu0 0.0
  %997 = vmatprep.subr.mxu0 0.0
  %998 = vmatpush1.msra.mxu0 0.0
  %999 = vmatprep.mubr.f32.mxu0 0.0
  %1000 = vmatmul.mubr.f32.gmra.mrb[0].mxu0 %v896
  %v1001 = vpop.f32.mrb[0].mxu0
  %v1002 = vadd.f32 %v933, %v1001
  %v1003 = vpop.f32.mrb[0].mxu0
  %1004 = vmatprep.mubr.f32.mxu0 0.0
  %1005 = vmatmul.mubr.f32.gmra.mrb[0].mxu0 %v897
  %v1006 = vpop.f32.mrb[0].mxu0
  %v1007 = vadd.f32 %v933, %v1006
  %v1008 = vpop.f32.mrb[0].mxu0
  %1009 = vmatprep.mubr.f32.mxu0 0.0
  %1010 = vmatmul.mubr.f32.gmra.mrb[0].mxu0 %v898
  %v1011 = vpop.f32.mrb[0].mxu0
  %v1012 = vadd.f32 %v933, %v1011
  %v1013 = vpop.f32.mrb[0].mxu0
  %1014 = vmatprep.mubr.f32.mxu0 0.0
  %1015 = vmatmul.mubr.f32.gmra.mrb[0].mxu0 %v899
  %v1016 = vpop.f32.mrb[0].mxu0
  %v1017 = vadd.f32 %v933, %v1016
  %v1018 = vpop.f32.mrb[0].mxu0
  %1019 = vmatprep.mubr.f32.mxu0 0.0
  %1020 = vmatmul.mubr.f32.gmra.mrb[0].mxu0 %v900
  %v1021 = vpop.f32.mrb[0].mxu0
  %v1022 = vadd.f32 %v933, %v1021
  %v1023 = vpop.f32.mrb[0].mxu0
  %1024 = vmatprep.mubr.f32.mxu0 0.0
  %1025 = vmatmul.mubr.f32.gmra.mrb[0].mxu0 %v901
  %v1026 = vpop.f32.mrb[0].mxu0
  %v1027 = vadd.f32 %v933, %v1026
  %v1028 = vpop.f32.mrb[0].mxu0
  %1029 = vmatprep.mubr.f32.mxu0 0.0
  %1030 = vmatmul.mubr.f32.gmra.mrb[0].mxu0 %v902
  %v1031 = vpop.f32.mrb[0].mxu0
  %v1032 = vadd.f32 %v933, %v1031
  %v1033 = vpop.f32.mrb[0].mxu0
  %1034 = vmatprep.mubr.f32.mxu0 0.0
  %1035 = vmatmul.mubr.f32.gmra.mrb[0].mxu0 %v903
  %v1036 = vpop.f32.mrb[0].mxu0
  %v1037 = vadd.f32 %v933, %v1036
  %v1038 = vpop.f32.mrb[0].mxu0
  %1039 = vmatprep.mubr.f32.mxu0 0.0
  %1040 = vmatmul.mubr.f32.gmra.mrb[0].mxu0 %v904
  %v1041 = vpop.f32.mrb[0].mxu0
  %v1042 = vadd.f32 %v933, %v1041
  %v1043 = vpop.f32.mrb[0].mxu0
  %1044 = vmatprep.mubr.f32.mxu0 0.0
  %1045 = vmatmul.mubr.f32.gmra.mrb[0].mxu0 %v905
  %v1046 = vpop.f32.mrb[0].mxu0
  %v1047 = vadd.f32 %v933, %v1046
  %v1048 = vpop.f32.mrb[0].mxu0
  %1049 = vmatprep.mubr.f32.mxu0 0.0
  %1050 = vmatmul.mubr.f32.gmra.mrb[0].mxu0 %v906
  %v1051 = vpop.f32.mrb[0].mxu0
  %v1052 = vadd.f32 %v933, %v1051
  %v1053 = vpop.f32.mrb[0].mxu0
  %1054 = vmatprep.mubr.f32.mxu0 0.0
  %1055 = vmatmul.mubr.f32.gmra.mrb[0].mxu0 %v907
  %v1056 = vpop.f32.mrb[0].mxu0
  %v1057 = vadd.f32 %v933, %v1056
  %v1058 = vpop.f32.mrb[0].mxu0
  %1059 = vmatprep.mubr.f32.mxu0 0.0
  %1060 = vmatmul.mubr.f32.gmra.mrb[0].mxu0 %v908
  %v1061 = vpop.f32.mrb[0].mxu0
  %v1062 = vadd.f32 %v933, %v1061
  %v1063 = vpop.f32.mrb[0].mxu0
  %1064 = vmatprep.mubr.f32.mxu0 0.0
  %1065 = vmatmul.mubr.f32.gmra.mrb[0].mxu0 %v909
  %v1066 = vpop.f32.mrb[0].mxu0
  %v1067 = vadd.f32 %v933, %v1066
  %v1068 = vpop.f32.mrb[0].mxu0
  %1069 = vmatprep.mubr.f32.mxu0 0.0
  %1070 = vmatmul.mubr.f32.gmra.mrb[0].mxu0 %v910
  %v1071 = vpop.f32.mrb[0].mxu0
  %v1072 = vadd.f32 %v933, %v1071
  %v1073 = vpop.f32.mrb[0].mxu0
  %1074 = vmatprep.mubr.f32.mxu0 0.0
  %1075 = vmatmul.mubr.f32.gmra.mrb[0].mxu0 %v911
  %v1076 = vpop.f32.mrb[0].mxu0
  %v1077 = vadd.f32 %v933, %v1076
  %v1078 = vpop.f32.mrb[0].mxu0
  %1079 = vdwg.mxu0
  %v1080 = vmul.f32 %v1002, 0.5
  %v1081 = vmul.f32 %v1007, 0.5
  %v1082 = vmul.f32 %v1012, 0.5
  %v1083 = vmul.f32 %v1017, 0.5
  %v1084 = vmul.f32 %v1022, 0.5
  %v1085 = vmul.f32 %v1027, 0.5
  %v1086 = vmul.f32 %v1032, 0.5
  %v1087 = vmul.f32 %v1037, 0.5
  %v1088 = vmul.f32 %v1042, 0.5
  %v1089 = vmul.f32 %v1047, 0.5
  %v1090 = vmul.f32 %v1052, 0.5
  %v1091 = vmul.f32 %v1057, 0.5
  %v1092 = vmul.f32 %v1062, 0.5
  %v1093 = vmul.f32 %v1067, 0.5
  %v1094 = vmul.f32 %v1072, 0.5
  %v1095 = vmul.f32 %v1077, 0.5
  %v1096 = vtanh.pop %v1080
  %v1097 = vtanh.pop %v1081
  %v1098 = vtanh.pop %v1082
  %v1099 = vtanh.pop %v1083
  %v1100 = vtanh.pop %v1084
  %v1101 = vtanh.pop %v1085
  %v1102 = vtanh.pop %v1086
  %v1103 = vtanh.pop %v1087
  %v1104 = vtanh.pop %v1088
  %v1105 = vtanh.pop %v1089
  %v1106 = vtanh.pop %v1090
  %v1107 = vtanh.pop %v1091
  %v1108 = vtanh.pop %v1092
  %v1109 = vtanh.pop %v1093
  %v1110 = vtanh.pop %v1094
  %v1111 = vtanh.pop %v1095
  %v1112 = vmul.f32 %v1096, 0.5
  %v1113 = vmul.f32 %v1097, 0.5
  %v1114 = vmul.f32 %v1098, 0.5
  %v1115 = vmul.f32 %v1099, 0.5
  %v1116 = vmul.f32 %v1100, 0.5
  %v1117 = vmul.f32 %v1101, 0.5
  %v1118 = vmul.f32 %v1102, 0.5
  %v1119 = vmul.f32 %v1103, 0.5
  %v1120 = vmul.f32 %v1104, 0.5
  %v1121 = vmul.f32 %v1105, 0.5
  %v1122 = vmul.f32 %v1106, 0.5
  %v1123 = vmul.f32 %v1107, 0.5
  %v1124 = vmul.f32 %v1108, 0.5
  %v1125 = vmul.f32 %v1109, 0.5
  %v1126 = vmul.f32 %v1110, 0.5
  %v1127 = vmul.f32 %v1111, 0.5
  %v1128 = vadd.f32 %v1112, 0.5
  %v1129 = vadd.f32 %v1113, 0.5
  %v1130 = vadd.f32 %v1114, 0.5
  %v1131 = vadd.f32 %v1115, 0.5
  %v1132 = vadd.f32 %v1116, 0.5
  %v1133 = vadd.f32 %v1117, 0.5
  %v1134 = vadd.f32 %v1118, 0.5
  %v1135 = vadd.f32 %v1119, 0.5
  %v1136 = vadd.f32 %v1120, 0.5
  %v1137 = vadd.f32 %v1121, 0.5
  %v1138 = vadd.f32 %v1122, 0.5
  %v1139 = vadd.f32 %v1123, 0.5
  %v1140 = vadd.f32 %v1124, 0.5
  %v1141 = vadd.f32 %v1125, 0.5
  %v1142 = vadd.f32 %v1126, 0.5
  %v1143 = vadd.f32 %v1127, 0.5
  %v1144 = vmul.f32 %v1002, %v1128
  %v1145 = vmul.f32 %v1007, %v1129
  %v1146 = vmul.f32 %v1012, %v1130
  %v1147 = vmul.f32 %v1017, %v1131
  %v1148 = vmul.f32 %v1022, %v1132
  %v1149 = vmul.f32 %v1027, %v1133
  %v1150 = vmul.f32 %v1032, %v1134
  %v1151 = vmul.f32 %v1037, %v1135
  %v1152 = vmul.f32 %v1042, %v1136
  %v1153 = vmul.f32 %v1047, %v1137
  %v1154 = vmul.f32 %v1052, %v1138
  %v1155 = vmul.f32 %v1057, %v1139
  %v1156 = vmul.f32 %v1062, %v1140
  %v1157 = vmul.f32 %v1067, %v1141
  %v1158 = vmul.f32 %v1072, %v1142
  %v1159 = vmul.f32 %v1077, %v1143
  %v1160 = vld [vmem:[%s6] sm:$0xf]
  %v1161 = vld [vmem:[%s4] sm:$0xff]
  %v1162 = vld [vmem:[%s4 + $0x8] sm:$0xff]
  %v1163 = vld [vmem:[%s4 + $0x10] sm:$0xff]
  %v1164 = vld [vmem:[%s4 + $0x18] sm:$0xff]
  %v1165 = vld [vmem:[%s4 + $0x20] sm:$0xff]
  %v1166 = vld [vmem:[%s4 + $0x28] sm:$0xff]
  %v1167 = vld [vmem:[%s4 + $0x30] sm:$0xff]
  %v1168 = vld [vmem:[%s4 + $0x38] sm:$0xff]
  %v1169 = vld [vmem:[%s4 + $0x40] sm:$0xff]
  %v1170 = vld [vmem:[%s4 + $0x48] sm:$0xff]
  %v1171 = vld [vmem:[%s4 + $0x50] sm:$0xff]
  %v1172 = vld [vmem:[%s4 + $0x58] sm:$0xff]
  %v1173 = vld [vmem:[%s4 + $0x60] sm:$0xff]
  %v1174 = vld [vmem:[%s4 + $0x68] sm:$0xff]
  %v1175 = vld [vmem:[%s4 + $0x70] sm:$0xff]
  %v1176 = vld [vmem:[%s4 + $0x78] sm:$0xff]
  %1177 = vmatprep.subr.mxu0 0.0
  %1178 = vmatpush1.msra.mxu0 %v1144
  %1179 = vmatprep.subr.mxu0 0.0
  %1180 = vmatpush1.msra.mxu0 %v1145
  %1181 = vmatprep.subr.mxu0 0.0
  %1182 = vmatpush1.msra.mxu0 %v1146
  %1183 = vmatprep.subr.mxu0 0.0
  %1184 = vmatpush1.msra.mxu0 %v1147
  %1185 = vmatprep.subr.mxu0 0.0
  %1186 = vmatpush1.msra.mxu0 %v1148
  %1187 = vmatprep.subr.mxu0 0.0
  %1188 = vmatpush1.msra.mxu0 %v1149
  %1189 = vmatprep.subr.mxu0 0.0
  %1190 = vmatpush1.msra.mxu0 %v1150
  %1191 = vmatprep.subr.mxu0 0.0
  %1192 = vmatpush1.msra.mxu0 %v1151
  %1193 = vmatprep.subr.mxu0 0.0
  %1194 = vmatpush1.msra.mxu0 %v1152
  %1195 = vmatprep.subr.mxu0 0.0
  %1196 = vmatpush1.msra.mxu0 %v1153
  %1197 = vmatprep.subr.mxu0 0.0
  %1198 = vmatpush1.msra.mxu0 %v1154
  %1199 = vmatprep.subr.mxu0 0.0
  %1200 = vmatpush1.msra.mxu0 %v1155
  %1201 = vmatprep.subr.mxu0 0.0
  %1202 = vmatpush1.msra.mxu0 %v1156
  %1203 = vmatprep.subr.mxu0 0.0
  %1204 = vmatpush1.msra.mxu0 %v1157
  %1205 = vmatprep.subr.mxu0 0.0
  %1206 = vmatpush1.msra.mxu0 %v1158
  %1207 = vmatprep.subr.mxu0 0.0
  %1208 = vmatpush1.msra.mxu0 %v1159
  %1209 = vmatprep.subr.mxu0 0.0
  %1210 = vmatpush1.msra.mxu0 0.0
  %1211 = vmatprep.subr.mxu0 0.0
  %1212 = vmatpush1.msra.mxu0 0.0
  %1213 = vmatprep.subr.mxu0 0.0
  %1214 = vmatpush1.msra.mxu0 0.0
  %1215 = vmatprep.subr.mxu0 0.0
  %1216 = vmatpush1.msra.mxu0 0.0
  %1217 = vmatprep.subr.mxu0 0.0
  %1218 = vmatpush1.msra.mxu0 0.0
  %1219 = vmatprep.subr.mxu0 0.0
  %1220 = vmatpush1.msra.mxu0 0.0
  %1221 = vmatprep.subr.mxu0 0.0
  %1222 = vmatpush1.msra.mxu0 0.0
  %1223 = vmatprep.subr.mxu0 0.0
  %1224 = vmatpush1.msra.mxu0 0.0
  %1225 = vmatprep.subr.mxu0 0.0
  %1226 = vmatpush1.msra.mxu0 0.0
  %1227 = vmatprep.subr.mxu0 0.0
  %1228 = vmatpush1.msra.mxu0 0.0
  %1229 = vmatprep.subr.mxu0 0.0
  %1230 = vmatpush1.msra.mxu0 0.0
  %1231 = vmatprep.subr.mxu0 0.0
  %1232 = vmatpush1.msra.mxu0 0.0
  %1233 = vmatprep.subr.mxu0 0.0
  %1234 = vmatpush1.msra.mxu0 0.0
  %1235 = vmatprep.subr.mxu0 0.0
  %1236 = vmatpush1.msra.mxu0 0.0
  %1237 = vmatprep.subr.mxu0 0.0
  %1238 = vmatpush1.msra.mxu0 0.0
  %1239 = vmatprep.subr.mxu0 0.0
  %1240 = vmatpush1.msra.mxu0 0.0
  %1241 = vmatprep.mubr.f32.mxu0 0.0
  %1242 = vmatmul.mubr.f32.gmra.mrb[0].mxu0 %v1160
  %v1243 = vpop.f32.mrb[0].mxu0
  %v1244 = vadd.f32 0.0, %v1243
  %v1245 = vpop.f32.mrb[0].mxu0
  %1246 = vdwg.mxu0
  %v1247 = vmul.f32 %v1144, %v1144
  %v1248 = vmul.f32 %v1145, %v1145
  %v1249 = vmul.f32 %v1146, %v1146
  %v1250 = vmul.f32 %v1147, %v1147
  %v1251 = vmul.f32 %v1148, %v1148
  %v1252 = vmul.f32 %v1149, %v1149
  %v1253 = vmul.f32 %v1150, %v1150
  %v1254 = vmul.f32 %v1151, %v1151
  %v1255 = vmul.f32 %v1152, %v1152
  %v1256 = vmul.f32 %v1153, %v1153
  %v1257 = vmul.f32 %v1154, %v1154
  %v1258 = vmul.f32 %v1155, %v1155
  %v1259 = vmul.f32 %v1156, %v1156
  %v1260 = vmul.f32 %v1157, %v1157
  %v1261 = vmul.f32 %v1158, %v1158
  %v1262 = vmul.f32 %v1159, %v1159
  %1263 = vmatprep.subr.mxu0 0.0
  %1264 = vmatpush1.msra.mxu0 %v1247
  %1265 = vmatprep.subr.mxu0 0.0
  %1266 = vmatpush1.msra.mxu0 %v1248
  %1267 = vmatprep.subr.mxu0 0.0
  %1268 = vmatpush1.msra.mxu0 %v1249
  %1269 = vmatprep.subr.mxu0 0.0
  %1270 = vmatpush1.msra.mxu0 %v1250
  %1271 = vmatprep.subr.mxu0 0.0
  %1272 = vmatpush1.msra.mxu0 %v1251
  %1273 = vmatprep.subr.mxu0 0.0
  %1274 = vmatpush1.msra.mxu0 %v1252
  %1275 = vmatprep.subr.mxu0 0.0
  %1276 = vmatpush1.msra.mxu0 %v1253
  %1277 = vmatprep.subr.mxu0 0.0
  %1278 = vmatpush1.msra.mxu0 %v1254
  %1279 = vmatprep.subr.mxu0 0.0
  %1280 = vmatpush1.msra.mxu0 %v1255
  %1281 = vmatprep.subr.mxu0 0.0
  %1282 = vmatpush1.msra.mxu0 %v1256
  %1283 = vmatprep.subr.mxu0 0.0
  %1284 = vmatpush1.msra.mxu0 %v1257
  %1285 = vmatprep.subr.mxu0 0.0
  %1286 = vmatpush1.msra.mxu0 %v1258
  %1287 = vmatprep.subr.mxu0 0.0
  %1288 = vmatpush1.msra.mxu0 %v1259
  %1289 = vmatprep.subr.mxu0 0.0
  %1290 = vmatpush1.msra.mxu0 %v1260
  %1291 = vmatprep.subr.mxu0 0.0
  %1292 = vmatpush1.msra.mxu0 %v1261
  %1293 = vmatprep.subr.mxu0 0.0
  %1294 = vmatpush1.msra.mxu0 %v1262
  %1295 = vmatprep.subr.mxu0 0.0
  %1296 = vmatpush1.msra.mxu0 0.0
  %1297 = vmatprep.subr.mxu0 0.0
  %1298 = vmatpush1.msra.mxu0 0.0
  %1299 = vmatprep.subr.mxu0 0.0
  %1300 = vmatpush1.msra.mxu0 0.0
  %1301 = vmatprep.subr.mxu0 0.0
  %1302 = vmatpush1.msra.mxu0 0.0
  %1303 = vmatprep.subr.mxu0 0.0
  %1304 = vmatpush1.msra.mxu0 0.0
  %1305 = vmatprep.subr.mxu0 0.0
  %1306 = vmatpush1.msra.mxu0 0.0
  %1307 = vmatprep.subr.mxu0 0.0
  %1308 = vmatpush1.msra.mxu0 0.0
  %1309 = vmatprep.subr.mxu0 0.0
  %1310 = vmatpush1.msra.mxu0 0.0
  %1311 = vmatprep.subr.mxu0 0.0
  %1312 = vmatpush1.msra.mxu0 0.0
  %1313 = vmatprep.subr.mxu0 0.0
  %1314 = vmatpush1.msra.mxu0 0.0
  %1315 = vmatprep.subr.mxu0 0.0
  %1316 = vmatpush1.msra.mxu0 0.0
  %1317 = vmatprep.subr.mxu0 0.0
  %1318 = vmatpush1.msra.mxu0 0.0
  %1319 = vmatprep.subr.mxu0 0.0
  %1320 = vmatpush1.msra.mxu0 0.0
  %1321 = vmatprep.subr.mxu0 0.0
  %1322 = vmatpush1.msra.mxu0 0.0
  %1323 = vmatprep.subr.mxu0 0.0
  %1324 = vmatpush1.msra.mxu0 0.0
  %1325 = vmatprep.subr.mxu0 0.0
  %1326 = vmatpush1.msra.mxu0 0.0
  %1327 = vmatprep.mubr.f32.mxu0 0.0
  %1328 = vmatmul.mubr.f32.gmra.mrb[0].mxu0 %v1160
  %v1329 = vpop.f32.mrb[0].mxu0
  %v1330 = vadd.f32 0.0, %v1329
  %v1331 = vpop.f32.mrb[0].mxu0
  %1332 = vdwg.mxu0
  %1333 = vmatprep.subr.mxu0 0.0
  %1334 = vmatpush1.msra.mxu0 %v1161
  %1335 = vmatprep.subr.mxu0 0.0
  %1336 = vmatpush1.msra.mxu0 %v1162
  %1337 = vmatprep.subr.mxu0 0.0
  %1338 = vmatpush1.msra.mxu0 %v1163
  %1339 = vmatprep.subr.mxu0 0.0
  %1340 = vmatpush1.msra.mxu0 %v1164
  %1341 = vmatprep.subr.mxu0 0.0
  %1342 = vmatpush1.msra.mxu0 %v1165
  %1343 = vmatprep.subr.mxu0 0.0
  %1344 = vmatpush1.msra.mxu0 %v1166
  %1345 = vmatprep.subr.mxu0 0.0
  %1346 = vmatpush1.msra.mxu0 %v1167
  %1347 = vmatprep.subr.mxu0 0.0
  %1348 = vmatpush1.msra.mxu0 %v1168
  %1349 = vmatprep.subr.mxu0 0.0
  %1350 = vmatpush1.msra.mxu0 %v1169
  %1351 = vmatprep.subr.mxu0 0.0
  %1352 = vmatpush1.msra.mxu0 %v1170
  %1353 = vmatprep.subr.mxu0 0.0
  %1354 = vmatpush1.msra.mxu0 %v1171
  %1355 = vmatprep.subr.mxu0 0.0
  %1356 = vmatpush1.msra.mxu0 %v1172
  %1357 = vmatprep.subr.mxu0 0.0
  %1358 = vmatpush1.msra.mxu0 %v1173
  %1359 = vmatprep.subr.mxu0 0.0
  %1360 = vmatpush1.msra.mxu0 %v1174
  %1361 = vmatprep.subr.mxu0 0.0
  %1362 = vmatpush1.msra.mxu0 %v1175
  %1363 = vmatprep.subr.mxu0 0.0
  %1364 = vmatpush1.msra.mxu0 %v1176
  %1365 = vmatprep.subr.mxu0 0.0
  %1366 = vmatpush1.msra.mxu0 0.0
  %1367 = vmatprep.subr.mxu0 0.0
  %1368 = vmatpush1.msra.mxu0 0.0
  %1369 = vmatprep.subr.mxu0 0.0
  %1370 = vmatpush1.msra.mxu0 0.0
  %1371 = vmatprep.subr.mxu0 0.0
  %1372 = vmatpush1.msra.mxu0 0.0
  %1373 = vmatprep.subr.mxu0 0.0
  %1374 = vmatpush1.msra.mxu0 0.0
  %1375 = vmatprep.subr.mxu0 0.0
  %1376 = vmatpush1.msra.mxu0 0.0
  %1377 = vmatprep.subr.mxu0 0.0
  %1378 = vmatpush1.msra.mxu0 0.0
  %1379 = vmatprep.subr.mxu0 0.0
  %1380 = vmatpush1.msra.mxu0 0.0
  %1381 = vmatprep.subr.mxu0 0.0
  %1382 = vmatpush1.msra.mxu0 0.0
  %1383 = vmatprep.subr.mxu0 0.0
  %1384 = vmatpush1.msra.mxu0 0.0
  %1385 = vmatprep.subr.mxu0 0.0
  %1386 = vmatpush1.msra.mxu0 0.0
  %1387 = vmatprep.subr.mxu0 0.0
  %1388 = vmatpush1.msra.mxu0 0.0
  %1389 = vmatprep.subr.mxu0 0.0
  %1390 = vmatpush1.msra.mxu0 0.0
  %1391 = vmatprep.subr.mxu0 0.0
  %1392 = vmatpush1.msra.mxu0 0.0
  %1393 = vmatprep.subr.mxu0 0.0
  %1394 = vmatpush1.msra.mxu0 0.0
  %1395 = vmatprep.subr.mxu0 0.0
  %1396 = vmatpush1.msra.mxu0 0.0
  %1397 = vmatprep.mubr.f32.mxu0 0.0
  %1398 = vmatmul.mubr.f32.gmra.mrb[0].mxu0 %v1244
  %v1399 = vpop.f32.mrb[0].mxu0
  %v1400 = vadd.f32 0.0, %v1399
  %v1401 = vpop.f32.mrb[0].mxu0
  %1402 = vdwg.mxu0
  %1403 = vmatprep.subr.mxu0 0.0
  %1404 = vmatpush1.msra.mxu0 %v1161
  %1405 = vmatprep.subr.mxu0 0.0
  %1406 = vmatpush1.msra.mxu0 %v1162
  %1407 = vmatprep.subr.mxu0 0.0
  %1408 = vmatpush1.msra.mxu0 %v1163
  %1409 = vmatprep.subr.mxu0 0.0
  %1410 = vmatpush1.msra.mxu0 %v1164
  %1411 = vmatprep.subr.mxu0 0.0
  %1412 = vmatpush1.msra.mxu0 %v1165
  %1413 = vmatprep.subr.mxu0 0.0
  %1414 = vmatpush1.msra.mxu0 %v1166
  %1415 = vmatprep.subr.mxu0 0.0
  %1416 = vmatpush1.msra.mxu0 %v1167
  %1417 = vmatprep.subr.mxu0 0.0
  %1418 = vmatpush1.msra.mxu0 %v1168
  %1419 = vmatprep.subr.mxu0 0.0
  %1420 = vmatpush1.msra.mxu0 %v1169
  %1421 = vmatprep.subr.mxu0 0.0
  %1422 = vmatpush1.msra.mxu0 %v1170
  %1423 = vmatprep.subr.mxu0 0.0
  %1424 = vmatpush1.msra.mxu0 %v1171
  %1425 = vmatprep.subr.mxu0 0.0
  %1426 = vmatpush1.msra.mxu0 %v1172
  %1427 = vmatprep.subr.mxu0 0.0
  %1428 = vmatpush1.msra.mxu0 %v1173
  %1429 = vmatprep.subr.mxu0 0.0
  %1430 = vmatpush1.msra.mxu0 %v1174
  %1431 = vmatprep.subr.mxu0 0.0
  %1432 = vmatpush1.msra.mxu0 %v1175
  %1433 = vmatprep.subr.mxu0 0.0
  %1434 = vmatpush1.msra.mxu0 %v1176
  %1435 = vmatprep.subr.mxu0 0.0
  %1436 = vmatpush1.msra.mxu0 0.0
  %1437 = vmatprep.subr.mxu0 0.0
  %1438 = vmatpush1.msra.mxu0 0.0
  %1439 = vmatprep.subr.mxu0 0.0
  %1440 = vmatpush1.msra.mxu0 0.0
  %1441 = vmatprep.subr.mxu0 0.0
  %1442 = vmatpush1.msra.mxu0 0.0
  %1443 = vmatprep.subr.mxu0 0.0
  %1444 = vmatpush1.msra.mxu0 0.0
  %1445 = vmatprep.subr.mxu0 0.0
  %1446 = vmatpush1.msra.mxu0 0.0
  %1447 = vmatprep.subr.mxu0 0.0
  %1448 = vmatpush1.msra.mxu0 0.0
  %1449 = vmatprep.subr.mxu0 0.0
  %1450 = vmatpush1.msra.mxu0 0.0
  %1451 = vmatprep.subr.mxu0 0.0
  %1452 = vmatpush1.msra.mxu0 0.0
  %1453 = vmatprep.subr.mxu0 0.0
  %1454 = vmatpush1.msra.mxu0 0.0
  %1455 = vmatprep.subr.mxu0 0.0
  %1456 = vmatpush1.msra.mxu0 0.0
  %1457 = vmatprep.subr.mxu0 0.0
  %1458 = vmatpush1.msra.mxu0 0.0
  %1459 = vmatprep.subr.mxu0 0.0
  %1460 = vmatpush1.msra.mxu0 0.0
  %1461 = vmatprep.subr.mxu0 0.0
  %1462 = vmatpush1.msra.mxu0 0.0
  %1463 = vmatprep.subr.mxu0 0.0
  %1464 = vmatpush1.msra.mxu0 0.0
  %1465 = vmatprep.subr.mxu0 0.0
  %1466 = vmatpush1.msra.mxu0 0.0
  %1467 = vmatprep.mubr.f32.mxu0 0.0
  %1468 = vmatmul.mubr.f32.gmra.mrb[0].mxu0 %v1330
  %v1469 = vpop.f32.mrb[0].mxu0
  %v1470 = vadd.f32 0.0, %v1469
  %v1471 = vpop.f32.mrb[0].mxu0
  %1472 = vdwg.mxu0
  %v1473 = vmul.f32 %v1400, 0.001953125
  %v1474 = vmul.f32 %v1470, 0.001953125
  %v1475 = vmul.f32 %v1473, %v1473
  %v1476 = vsub.f32 %v1474, %v1475
  %v1477 = vld [vmem:[%s7] sm:$0xf]
  %v1478 = vadd.f32 %v1476, 1e-05
  %v1479 = vrsqrt.pop %v1478
  %v1480 = vmul.f32 %v1477, %v1479
  %v1481 = vld [vmem:[%s5] sm:$0xff]
  %vm1482 = vcmask 64512
  %v1484 = vsel %vm1482, %v1473, 0
  %1486 = vmatprep.subr.mxu0 0.0
  %1487 = vmatpush1.msra.mxu0 %v1481
  %1488 = vmatprep.subr.mxu0 0.0
  %1489 = vmatpush1.msra.mxu0 0.0
  %1490 = vmatprep.subr.mxu0 0.0
  %1491 = vmatpush1.msra.mxu0 0.0
  %1492 = vmatprep.subr.mxu0 0.0
  %1493 = vmatpush1.msra.mxu0 0.0
  %1494 = vmatprep.subr.mxu0 0.0
  %1495 = vmatpush1.msra.mxu0 0.0
  %1496 = vmatprep.subr.mxu0 0.0
  %1497 = vmatpush1.msra.mxu0 0.0
  %1498 = vmatprep.subr.mxu0 0.0
  %1499 = vmatpush1.msra.mxu0 0.0
  %1500 = vmatprep.subr.mxu0 0.0
  %1501 = vmatpush1.msra.mxu0 0.0
  %1502 = vmatprep.subr.mxu0 0.0
  %1503 = vmatpush1.msra.mxu0 0.0
  %1504 = vmatprep.subr.mxu0 0.0
  %1505 = vmatpush1.msra.mxu0 0.0
  %1506 = vmatprep.subr.mxu0 0.0
  %1507 = vmatpush1.msra.mxu0 0.0
  %1508 = vmatprep.subr.mxu0 0.0
  %1509 = vmatpush1.msra.mxu0 0.0
  %1510 = vmatprep.subr.mxu0 0.0
  %1511 = vmatpush1.msra.mxu0 0.0
  %1512 = vmatprep.subr.mxu0 0.0
  %1513 = vmatpush1.msra.mxu0 0.0
  %1514 = vmatprep.subr.mxu0 0.0
  %1515 = vmatpush1.msra.mxu0 0.0
  %1516 = vmatprep.subr.mxu0 0.0
  %1517 = vmatpush1.msra.mxu0 0.0
  %1518 = vmatprep.subr.mxu0 0.0
  %1519 = vmatpush1.msra.mxu0 0.0
  %1520 = vmatprep.subr.mxu0 0.0
  %1521 = vmatpush1.msra.mxu0 0.0
  %1522 = vmatprep.subr.mxu0 0.0
  %1523 = vmatpush1.msra.mxu0 0.0
  %1524 = vmatprep.subr.mxu0 0.0
  %1525 = vmatpush1.msra.mxu0 0.0
  %1526 = vmatprep.subr.mxu0 0.0
  %1527 = vmatpush1.msra.mxu0 0.0
  %1528 = vmatprep.subr.mxu0 0.0
  %1529 = vmatpush1.msra.mxu0 0.0
  %1530 = vmatprep.subr.mxu0 0.0
  %1531 = vmatpush1.msra.mxu0 0.0
  %1532 = vmatprep.subr.mxu0 0.0
  %1533 = vmatpush1.msra.mxu0 0.0
  %1534 = vmatprep.subr.mxu0 0.0
  %1535 = vmatpush1.msra.mxu0 0.0
  %1536 = vmatprep.subr.mxu0 0.0
  %1537 = vmatpush1.msra.mxu0 0.0
  %1538 = vmatprep.subr.mxu0 0.0
  %1539 = vmatpush1.msra.mxu0 0.0
  %1540 = vmatprep.subr.mxu0 0.0
  %1541 = vmatpush1.msra.mxu0 0.0
  %1542 = vmatprep.subr.mxu0 0.0
  %1543 = vmatpush1.msra.mxu0 0.0
  %1544 = vmatprep.subr.mxu0 0.0
  %1545 = vmatpush1.msra.mxu0 0.0
  %1546 = vmatprep.subr.mxu0 0.0
  %1547 = vmatpush1.msra.mxu0 0.0
  %1548 = vmatprep.subr.mxu0 0.0
  %1549 = vmatpush1.msra.mxu0 0.0
  %1550 = vmatprep.mubr.f32.mxu0 0.0
  %1551 = vmatmul.mubr.f32.gmra.mrb[0].mxu0 %v1484
  %v1552 = vpop.f32.mrb[0].mxu0
  %v1553 = vadd.f32 0.0, %v1552
  %v1554 = vpop.f32.mrb[0].mxu0
  %1555 = vdwg.mxu0
  %v1557 = vsel %vm1482, %v1480, 0
  %1559 = vmatprep.subr.mxu0 0.0
  %1560 = vmatpush1.msra.mxu0 %v1481
  %1561 = vmatprep.subr.mxu0 0.0
  %1562 = vmatpush1.msra.mxu0 0.0
  %1563 = vmatprep.subr.mxu0 0.0
  %1564 = vmatpush1.msra.mxu0 0.0
  %1565 = vmatprep.subr.mxu0 0.0
  %1566 = vmatpush1.msra.mxu0 0.0
  %1567 = vmatprep.subr.mxu0 0.0
  %1568 = vmatpush1.msra.mxu0 0.0
  %1569 = vmatprep.subr.mxu0 0.0
  %1570 = vmatpush1.msra.mxu0 0.0
  %1571 = vmatprep.subr.mxu0 0.0
  %1572 = vmatpush1.msra.mxu0 0.0
  %1573 = vmatprep.subr.mxu0 0.0
  %1574 = vmatpush1.msra.mxu0 0.0
  %1575 = vmatprep.subr.mxu0 0.0
  %1576 = vmatpush1.msra.mxu0 0.0
  %1577 = vmatprep.subr.mxu0 0.0
  %1578 = vmatpush1.msra.mxu0 0.0
  %1579 = vmatprep.subr.mxu0 0.0
  %1580 = vmatpush1.msra.mxu0 0.0
  %1581 = vmatprep.subr.mxu0 0.0
  %1582 = vmatpush1.msra.mxu0 0.0
  %1583 = vmatprep.subr.mxu0 0.0
  %1584 = vmatpush1.msra.mxu0 0.0
  %1585 = vmatprep.subr.mxu0 0.0
  %1586 = vmatpush1.msra.mxu0 0.0
  %1587 = vmatprep.subr.mxu0 0.0
  %1588 = vmatpush1.msra.mxu0 0.0
  %1589 = vmatprep.subr.mxu0 0.0
  %1590 = vmatpush1.msra.mxu0 0.0
  %1591 = vmatprep.subr.mxu0 0.0
  %1592 = vmatpush1.msra.mxu0 0.0
  %1593 = vmatprep.subr.mxu0 0.0
  %1594 = vmatpush1.msra.mxu0 0.0
  %1595 = vmatprep.subr.mxu0 0.0
  %1596 = vmatpush1.msra.mxu0 0.0
  %1597 = vmatprep.subr.mxu0 0.0
  %1598 = vmatpush1.msra.mxu0 0.0
  %1599 = vmatprep.subr.mxu0 0.0
  %1600 = vmatpush1.msra.mxu0 0.0
  %1601 = vmatprep.subr.mxu0 0.0
  %1602 = vmatpush1.msra.mxu0 0.0
  %1603 = vmatprep.subr.mxu0 0.0
  %1604 = vmatpush1.msra.mxu0 0.0
  %1605 = vmatprep.subr.mxu0 0.0
  %1606 = vmatpush1.msra.mxu0 0.0
  %1607 = vmatprep.subr.mxu0 0.0
  %1608 = vmatpush1.msra.mxu0 0.0
  %1609 = vmatprep.subr.mxu0 0.0
  %1610 = vmatpush1.msra.mxu0 0.0
  %1611 = vmatprep.subr.mxu0 0.0
  %1612 = vmatpush1.msra.mxu0 0.0
  %1613 = vmatprep.subr.mxu0 0.0
  %1614 = vmatpush1.msra.mxu0 0.0
  %1615 = vmatprep.subr.mxu0 0.0
  %1616 = vmatpush1.msra.mxu0 0.0
  %1617 = vmatprep.subr.mxu0 0.0
  %1618 = vmatpush1.msra.mxu0 0.0
  %1619 = vmatprep.subr.mxu0 0.0
  %1620 = vmatpush1.msra.mxu0 0.0
  %1621 = vmatprep.subr.mxu0 0.0
  %1622 = vmatpush1.msra.mxu0 0.0
  %1623 = vmatprep.mubr.f32.mxu0 0.0
  %1624 = vmatmul.mubr.f32.gmra.mrb[0].mxu0 %v1557
  %v1625 = vpop.f32.mrb[0].mxu0
  %v1626 = vadd.f32 0.0, %v1625
  %v1627 = vpop.f32.mrb[0].mxu0
  %1628 = vdwg.mxu0
  %v1629 = vlaneseq
  %v1630 = vshrl.u32 %v1629, 7
  %v1631 = vsub.s32 0, %v1630
  %v1632 = vrot.slane %v1553, %v1631
  %v1633 = vsub.f32 %v1144, %v1632
  %v1634 = vsub.f32 %v1145, %v1632
  %v1635 = vsub.f32 %v1146, %v1632
  %v1636 = vsub.f32 %v1147, %v1632
  %v1637 = vlaneseq
  %v1638 = vshrl.u32 %v1637, 7
  %v1639 = vsub.s32 0, %v1638
  %v1640 = vrot.slane %v1626, %v1639
  %v1641 = vmul.f32 %v1633, %v1640
  %v1642 = vmul.f32 %v1634, %v1640
  %v1643 = vmul.f32 %v1635, %v1640
  %v1644 = vmul.f32 %v1636, %v1640
  %1645 = vst [vmem:[%s8] sm:$0xff] %v1641
  %1646 = vst [vmem:[%s8 + $0x8] sm:$0xff] %v1642
  %1647 = vst [vmem:[%s8 + $0x10] sm:$0xff] %v1643
  %1648 = vst [vmem:[%s8 + $0x18] sm:$0xff] %v1644
  %v1649 = vlaneseq
  %v1650 = vshrl.u32 %v1649, 7
  %v1651 = vsub.s32 1, %v1650
  %v1652 = vrot.slane %v1553, %v1651
  %v1653 = vsub.f32 %v1148, %v1652
  %v1654 = vsub.f32 %v1149, %v1652
  %v1655 = vsub.f32 %v1150, %v1652
  %v1656 = vsub.f32 %v1151, %v1652
  %v1657 = vlaneseq
  %v1658 = vshrl.u32 %v1657, 7
  %v1659 = vsub.s32 1, %v1658
  %v1660 = vrot.slane %v1626, %v1659
  %v1661 = vmul.f32 %v1653, %v1660
  %v1662 = vmul.f32 %v1654, %v1660
  %v1663 = vmul.f32 %v1655, %v1660
  %v1664 = vmul.f32 %v1656, %v1660
  %1665 = vst [vmem:[%s8 + $0x20] sm:$0xff] %v1661
  %1666 = vst [vmem:[%s8 + $0x28] sm:$0xff] %v1662
  %1667 = vst [vmem:[%s8 + $0x30] sm:$0xff] %v1663
  %1668 = vst [vmem:[%s8 + $0x38] sm:$0xff] %v1664
  %v1669 = vlaneseq
  %v1670 = vshrl.u32 %v1669, 7
  %v1671 = vsub.s32 2, %v1670
  %v1672 = vrot.slane %v1553, %v1671
  %v1673 = vsub.f32 %v1152, %v1672
  %v1674 = vsub.f32 %v1153, %v1672
  %v1675 = vsub.f32 %v1154, %v1672
  %v1676 = vsub.f32 %v1155, %v1672
  %v1677 = vlaneseq
  %v1678 = vshrl.u32 %v1677, 7
  %v1679 = vsub.s32 2, %v1678
  %v1680 = vrot.slane %v1626, %v1679
  %v1681 = vmul.f32 %v1673, %v1680
  %v1682 = vmul.f32 %v1674, %v1680
  %v1683 = vmul.f32 %v1675, %v1680
  %v1684 = vmul.f32 %v1676, %v1680
  %1685 = vst [vmem:[%s8 + $0x40] sm:$0xff] %v1681
  %1686 = vst [vmem:[%s8 + $0x48] sm:$0xff] %v1682
  %1687 = vst [vmem:[%s8 + $0x50] sm:$0xff] %v1683
  %1688 = vst [vmem:[%s8 + $0x58] sm:$0xff] %v1684
  %v1689 = vlaneseq
  %v1690 = vshrl.u32 %v1689, 7
  %v1691 = vsub.s32 3, %v1690
  %v1692 = vrot.slane %v1553, %v1691
  %v1693 = vsub.f32 %v1156, %v1692
  %v1694 = vsub.f32 %v1157, %v1692
  %v1695 = vsub.f32 %v1158, %v1692
  %v1696 = vsub.f32 %v1159, %v1692
  %v1697 = vlaneseq
  %v1698 = vshrl.u32 %v1697, 7
  %v1699 = vsub.s32 3, %v1698
  %v1700 = vrot.slane %v1626, %v1699
  %v1701 = vmul.f32 %v1693, %v1700
  %v1702 = vmul.f32 %v1694, %v1700
  %v1703 = vmul.f32 %v1695, %v1700
  %v1704 = vmul.f32 %v1696, %v1700
  %1705 = vst [vmem:[%s8 + $0x60] sm:$0xff] %v1701
  %1706 = vst [vmem:[%s8 + $0x68] sm:$0xff] %v1702
  %1707 = vst [vmem:[%s8 + $0x70] sm:$0xff] %v1703
  %1708 = vst [vmem:[%s8 + $0x78] sm:$0xff] %v1704
  // Predicated region
  $region34: #{_lambda_.1} parent=0 // pred_check
    _
  $region35: #{_lambda_.1} parent=0 // pred_check_branch
    %1710 = sbr.rel (0) target = $region37
  $region36: #{_lambda_.1} parent=0 // pred_region
    _
  $region37: #{_lambda_.1} parent=0 // pred_fallthru
    _
  // Predicated region
  $region38: #{_lambda_.1} parent=0 // pred_check
    _
  $region39: #{_lambda_.1} parent=0 // pred_check_branch
    %1712 = sbr.rel (0) target = $region41
  $region40: #{_lambda_.1} parent=0 // pred_region
    _
  $region41: #{_lambda_.1} parent=0 // pred_fallthru
    _

</llo_original>
